<compile_context>
chip_gen: v5e
topology: v5e:2x2
jax: 0.10.0
libtpu: 0.0.40
codegen_flags: <defaults>
</compile_context>

<pallas_src>
import functools

import jax
import jax.numpy as jnp
from jax import lax
from jax.experimental import pallas as pl
from jax.experimental.pallas import tpu as pltpu


def _round_up(x, m):
    return ((x + m - 1) // m) * m


def _cdiv(a, b):
    return -(-a // b)


# ----------------------------- Pallas kernel ---------------------------------

def _layernorm(y, gamma, beta, eps=1e-5):
    """LayerNorm over the last dim; y:(N,E) f32, gamma/beta:(1,E) f32."""
    mean = jnp.mean(y, axis=-1, keepdims=True)
    var = jnp.mean(jnp.square(y - mean), axis=-1, keepdims=True)
    return (y - mean) * lax.rsqrt(var + eps) * gamma + beta


def fused_classifier_kernel(x_ref, ing_ref, inb_ref, wqkv_ref, wout_ref,
                            lng_ref, lnb_ref, wh_ref, bh_ref, o_ref,
                            *, heads, dim, t_actual):
    """input_norm -> L residual attention blocks -> classifier head (CLS token).

    Processes one batch tile (bt, T_pad, E) per grid step.
    """
    bt, t_pad, e = x_ref.shape
    layers = wqkv_ref.shape[0]
    hd = heads * dim
    n = bt * t_pad
    bf16 = jnp.bfloat16

    # residual stream kept in f32, token-major (n, E)
    x = x_ref[...].reshape(n, e)
    x = _layernorm(x, ing_ref[...], inb_ref[...])          # input_norm

    # key-padding additive bias (f32), shared by all layers / heads / batch
    col = lax.broadcasted_iota(jnp.int32, (t_pad, t_pad), 1)
    pad_bias = jnp.where(col < t_actual, 0.0, -1e30).astype(jnp.float32)

    # NOTE: layers is small (2) -> static unroll.  For larger L, move layers to
    # an 'arbitrary' grid axis (residual in VMEM scratch) so layer-(l+1) weight
    # DMA pipelines under layer-l compute and register pressure stays bounded.
    for l in range(layers):
        wqkv = wqkv_ref[l]                                  # (E, 3*H*D) bf16, q pre-scaled
        wout = wout_ref[l]                                  # (H*D, E)   bf16

        # fused qkv projection (single big matmul, f32 accumulation)
        qkv = jnp.dot(x.astype(bf16), wqkv,
                      preferred_element_type=jnp.float32)   # (n, 3*H*D)
        qkv = qkv.astype(bf16).reshape(bt, t_pad, 3 * hd)   # cols laid out (k, h, d)

        # TODO(synk): a single two-batch-dim einsum ('bhid,bhjd->bhij') does not
        # lower in Mosaic (only one leading batch dim supported); keep the
        # per-head loop with single-leading-batch-dim dots.
        head_outs = []
        for h in range(heads):
            q = qkv[:, :, h * dim:(h + 1) * dim]                       # (bt, T, D)
            k = qkv[:, :, hd + h * dim:hd + (h + 1) * dim]             # (bt, T, D)
            v = qkv[:, :, 2 * hd + h * dim:2 * hd + (h + 1) * dim]     # (bt, T, D)

            # scale already folded into q weights at init
            s = jnp.einsum('bid,bjd->bij', q, k,
                           preferred_element_type=jnp.float32)         # (bt, T, T) f32
            s = s + pad_bias                                           # mask padded keys
            m = jnp.max(s, axis=-1, keepdims=True)
            p = jnp.exp(s - m)
            p = p * pl.reciprocal(jnp.sum(p, axis=-1, keepdims=True), approx=True)
            head_outs.append(
                jnp.einsum('bij,bjd->bid', p.astype(bf16), v,
                           preferred_element_type=jnp.float32))        # (bt, T, D)

        # fused output projection: one (n, H*D) x (H*D, E) matmul
        o_cat = jnp.concatenate(head_outs, axis=-1).reshape(n, hd)
        attn = jnp.dot(o_cat.astype(bf16), wout,
                       preferred_element_type=jnp.float32)             # (n, E)

        # dropout(p=0) == identity; block LayerNorm on (x + residual)
        x = _layernorm(x + attn, lng_ref[l], lnb_ref[l])

    # classifier head on the CLS token: single reshape + row-0 slice (no concat)
    cls = x.reshape(bt, t_pad, e)[:, 0, :]                             # (bt, E)
    logits = jnp.dot(cls.astype(bf16), wh_ref[...],
                     preferred_element_type=jnp.float32) + bh_ref[...]  # (bt, C_pad) f32
    o_ref[0] = logits                                                  # lane-dense store


# ------------------------------- JAX glue -------------------------------------

def bilinear_align_corners(img, oh, ow):
    """F.interpolate(..., mode='bilinear', align_corners=True) for NCHW img."""
    _, _, ih, iw = img.shape
    ys = (jnp.arange(oh, dtype=jnp.float32) * (ih - 1) / (oh - 1)
          if oh > 1 else jnp.zeros((oh,), jnp.float32))
    xs = (jnp.arange(ow, dtype=jnp.float32) * (iw - 1) / (ow - 1)
          if ow > 1 else jnp.zeros((ow,), jnp.float32))
    y0 = jnp.clip(jnp.floor(ys).astype(jnp.int32), 0, ih - 1)
    x0 = jnp.clip(jnp.floor(xs).astype(jnp.int32), 0, iw - 1)
    y1 = jnp.clip(y0 + 1, 0, ih - 1)
    x1 = jnp.clip(x0 + 1, 0, iw - 1)
    wy = (ys - y0.astype(jnp.float32))[None, None, :, None]
    wx = (xs - x0.astype(jnp.float32))[None, None, None, :]
    row0 = img[:, :, y0, :]
    row1 = img[:, :, y1, :]
    v00 = row0[:, :, :, x0]
    v01 = row0[:, :, :, x1]
    v10 = row1[:, :, :, x0]
    v11 = row1[:, :, :, x1]
    return (v00 * (1 - wy) * (1 - wx) + v01 * (1 - wy) * wx
            + v10 * wy * (1 - wx) + v11 * wy * wx)


def init_params(key, *, embd, dim, heads, layers, num_classes, attn_pos_size):
    keys = jax.random.split(key, 3 + 2 * layers)
    attn_std = embd ** (-0.5)
    proj_std = embd ** (-0.5) * (2 * layers) ** (-0.5)
    scale = dim ** (-0.5)
    hd = heads * dim
    c_pad = _round_up(num_classes, 128)

    params = {
        "cls_token": 0.02 * jax.random.normal(keys[0], (1, 1, embd), jnp.float32),
        "pos_embd": 0.01 * jax.random.normal(
            keys[1], (1, embd, attn_pos_size, attn_pos_size), jnp.float32),
        "input_norm": (jnp.ones((1, embd), jnp.float32),
                       jnp.zeros((1, embd), jnp.float32)),
    }
    kw, kb = jax.random.split(keys[2])
    bound = 1.0 / (embd ** 0.5)
    head_w = jax.random.uniform(
        kw, (num_classes, embd), jnp.float32, -bound, bound).T          # (E, C)
    head_b = jax.random.uniform(
        kb, (num_classes,), jnp.float32, -bound, bound).reshape(1, -1)  # (1, C)
    # lane-dense classifier: zero-pad classes to a multiple of 128 lanes
    params["head_w"] = jnp.pad(
        head_w, ((0, 0), (0, c_pad - num_classes))).astype(jnp.bfloat16)  # (E, C_pad)
    params["head_b"] = jnp.pad(head_b, ((0, 0), (0, c_pad - num_classes)))  # (1, C_pad) f32

    wqkv_l, wout_l = [], []
    for l in range(layers):
        k1, k2 = keys[3 + 2 * l], keys[4 + 2 * l]
        # PyTorch to_qkv Linear layout (out,in); output feature index = (k*D + d)*H + h
        w_qkv = attn_std * jax.random.normal(k1, (3 * dim * heads, embd), jnp.float32)
        # attn_out Linear: (embd, H*D); input feature index = h*D + d
        w_out = proj_std * jax.random.normal(k2, (embd, dim * heads), jnp.float32)
        # permute rows (k, d, h) -> (k, h, d), transpose for right-multiply
        w_qkv_r = (w_qkv.reshape(3, dim, heads, embd)
                   .transpose(0, 2, 1, 3)
                   .reshape(3 * hd, embd)).T                          # (E, 3*H*D)
        # fold the softmax scale dim**-0.5 into the q columns
        w_qkv_r = w_qkv_r.at[:, :hd].multiply(scale)
        wqkv_l.append(w_qkv_r)
        wout_l.append(w_out.T)                                        # (H*D, E)

    params["wqkv"] = jnp.stack(wqkv_l).astype(jnp.bfloat16)           # (L, E, 3*H*D)
    params["wout"] = jnp.stack(wout_l).astype(jnp.bfloat16)           # (L, H*D, E)
    params["ln_g"] = jnp.ones((layers, 1, embd), jnp.float32)
    params["ln_b"] = jnp.zeros((layers, 1, embd), jnp.float32)
    return params


def _select_tiling(b, t_pad, e, heads, dim, layers, c_pad):
    """Pick (batch_tile, n_grid_steps, vmem_limit_bytes).

    - batch_tile big enough to amortize per-step overhead / MXU drains
      (target >= 256 rows per step on the 256-wide v6e/v7x MXU),
    - capped by a VMEM formula (budget well under v7x's 64 MiB physical),
    - even number of grid steps (>=2) when b > 1 so v7x's two TensorCores
      both get work under dimension_semantics=("parallel",).
    """
    hd = heads * dim
    # resident weight bytes (constant index maps -> one copy in VMEM)
    weight_bytes = (layers * (e * 3 * hd + hd * e) * 2        # qkv / out-proj (bf16)
                    + layers * 2 * e * 4 + 2 * e * 4          # LayerNorm params (f32)
                    + e * c_pad * 2 + c_pad * 4)              # classifier head
    # per-batch-element bytes: double-buffered token tile + live f32 intermediates
    per_b = (2 * t_pad * e * 4            # pipelined input tile (2 buffers)
             + t_pad * e * 4              # residual
             + t_pad * 3 * hd * (4 + 2)   # qkv f32 accum + bf16 copy
             + 2 * t_pad * t_pad * 4      # scores + probs (one head live at a time)
             + t_pad * hd * 4)            # head outputs
    budget = 24 << 20                     # conservative: fits v7x (64 MiB) with headroom
    bt_vmem = max(1, (budget - weight_bytes) // per_b)
    bt_rows = max(1, _cdiv(256, t_pad))   # fill >=256 MXU rows per step
    bt = int(min(bt_vmem, bt_rows, max(1, _cdiv(b, 2))))
    if b > 1:
        n_steps = max(2, 2 * _cdiv(b, 2 * bt))     # even, >= 2
    else:
        n_steps = 1
    bt = _cdiv(b, n_steps)
    vmem_limit = int(min(max(2 * (weight_bytes + bt * per_b), 32 << 20), 100 << 20))
    return bt, n_steps, vmem_limit


def attention_classifier_forward(params, x, *, dim, heads, num_classes,
                                 avg_tokens=False):
    b, c_in, h, w = x.shape
    e = c_in
    embd_scale = e ** (-0.5)

    # ---- features_to_tokens (plain-JAX glue) ----
    pos = bilinear_align_corners(params["pos_embd"], h, w)            # (1, E, H, W)
    pos = pos.transpose(0, 2, 3, 1).reshape(1, h * w, e)              # (1, HW, E)
    xt = x.transpose(0, 2, 3, 1).reshape(b, h * w, e)                 # (B, HW, E)
    if avg_tokens:
        xt = jnp.concatenate([xt.mean(axis=1, keepdims=True), xt], axis=1)
        pos = jnp.concatenate([params["cls_token"], pos], axis=1)
    else:
        xt = jnp.concatenate(
            [jnp.broadcast_to(params["cls_token"], (b, 1, e)), xt], axis=1)
        pos = jnp.concatenate([jnp.zeros((1, 1, e), jnp.float32), pos], axis=1)
    tokens = xt + pos * embd_scale                                    # (B, T, E)

    t = tokens.shape[1]
    t_pad = _round_up(t, 8)
    layers = params["wqkv"].shape[0]
    hd3 = params["wqkv"].shape[2]
    hd = heads * dim
    c_pad = params["head_w"].shape[1]

    bt, n_steps, vmem_limit = _select_tiling(b, t_pad, e, heads, dim, layers, c_pad)
    b_pad = bt * n_steps
    tokens = jnp.pad(tokens, ((0, b_pad - b), (0, t_pad - t), (0, 0)))

    ing, inb = params["input_norm"]

    # advisory cost estimate for XLA's scheduler
    n_rows = bt * t_pad
    flops_layer = (2 * n_rows * e * hd3
                   + 4 * heads * bt * t_pad * t_pad * dim
                   + 2 * n_rows * hd * e)
    flops = n_steps * (layers * flops_layer + 2 * bt * e * c_pad)
    transcend = n_steps * layers * heads * bt * t_pad * (t_pad + 1)
    bytes_accessed = (tokens.size * 4 + b_pad * c_pad * 4
                      + n_steps * int(params["wqkv"].size * 2
                                      + params["wout"].size * 2
                                      + params["ln_g"].size * 8
                                      + 2 * e * 4
                                      + params["head_w"].size * 2 + c_pad * 4))

    kern = functools.partial(fused_classifier_kernel,
                             heads=heads, dim=dim, t_actual=t)
    out = pl.pallas_call(
        kern,
        out_shape=jax.ShapeDtypeStruct((n_steps, bt, c_pad), jnp.float32),
        grid=(n_steps,),
        in_specs=[
            pl.BlockSpec((bt, t_pad, e), lambda i: (i, 0, 0)),            # tokens
            pl.BlockSpec((1, e), lambda i: (0, 0)),                       # input LN gamma
            pl.BlockSpec((1, e), lambda i: (0, 0)),                       # input LN beta
            pl.BlockSpec((layers, e, hd3), lambda i: (0, 0, 0)),          # qkv weights
            pl.BlockSpec((layers, hd, e), lambda i: (0, 0, 0)),           # out-proj weights
            pl.BlockSpec((layers, 1, e), lambda i: (0, 0, 0)),            # block LN gamma
            pl.BlockSpec((layers, 1, e), lambda i: (0, 0, 0)),            # block LN beta
            pl.BlockSpec((e, c_pad), lambda i: (0, 0)),                   # head weight (padded)
            pl.BlockSpec((1, c_pad), lambda i: (0, 0)),                   # head bias (padded)
        ],
        out_specs=pl.BlockSpec((1, bt, c_pad), lambda i: (i, 0, 0)),      # lane-dense output
        compiler_params=pltpu.CompilerParams(
            dimension_semantics=("parallel",),
            vmem_limit_bytes=vmem_limit),
        cost_estimate=pl.CostEstimate(flops=int(flops),
                                      transcendentals=int(transcend),
                                      bytes_accessed=int(bytes_accessed)),
    )(tokens, ing, inb, params["wqkv"], params["wout"],
      params["ln_g"], params["ln_b"], params["head_w"], params["head_b"])

    return out.reshape(b_pad, c_pad)[:b, :num_classes]


# --------------------------------- main ----------------------------------------

if __name__ == "__main__":
    embd, dim, heads, layers, num_classes = 32, 8, 4, 2, 10
    attn_pos_size = 2
    batch, H, W = 2, 4, 4

    key = jax.random.PRNGKey(0)
    kp, kx = jax.random.split(key)
    params = init_params(kp, embd=embd, dim=dim, heads=heads, layers=layers,
                         num_classes=num_classes, attn_pos_size=attn_pos_size)
    x = jax.random.normal(kx, (batch, embd, H, W), jnp.float32)

    fwd = jax.jit(functools.partial(attention_classifier_forward,
                                    dim=dim, heads=heads,
                                    num_classes=num_classes))
    out = jax.block_until_ready(fwd(params, x))
    assert out.shape == (batch, num_classes)
    assert bool(jnp.all(jnp.isfinite(out)))
    print("KERNEL_OK")
</pallas_src>

<mosaic_0001>
module attributes {stable_mosaic.version = 11 : i64} {
  func.func @fused_classifier_kernel(%arg0: i32, %arg1: memref<1x24x32xf32, #tpu.memory_space<vmem>>, %arg2: memref<1x32xf32, #tpu.memory_space<vmem>>, %arg3: memref<1x32xf32, #tpu.memory_space<vmem>>, %arg4: memref<2x32x96xbf16, #tpu.memory_space<vmem>>, %arg5: memref<2x32x32xbf16, #tpu.memory_space<vmem>>, %arg6: memref<2x1x32xf32, #tpu.memory_space<vmem>>, %arg7: memref<2x1x32xf32, #tpu.memory_space<vmem>>, %arg8: memref<32x128xbf16, #tpu.memory_space<vmem>>, %arg9: memref<1x128xf32, #tpu.memory_space<vmem>>, %arg10: memref<1x1x128xf32, #tpu.memory_space<vmem>>) attributes {dimension_semantics = [#tpu.dimension_semantics<parallel>], iteration_bounds = array<i64: 2>, scalar_prefetch = 0 : i64, scratch_operands = 0 : i64, tpu.core_type = #tpu.core_type<tc>, window_params = [{transform_indices = @transform_0, window_bounds = array<i64: 1, 24, 32>}, {pipeline_mode = #tpu.pipeline_mode<synchronous>, transform_indices = @transform_1, window_bounds = array<i64: 1, 32>}, {pipeline_mode = #tpu.pipeline_mode<synchronous>, transform_indices = @transform_2, window_bounds = array<i64: 1, 32>}, {pipeline_mode = #tpu.pipeline_mode<synchronous>, transform_indices = @transform_3, window_bounds = array<i64: 2, 32, 96>}, {pipeline_mode = #tpu.pipeline_mode<synchronous>, transform_indices = @transform_4, window_bounds = array<i64: 2, 32, 32>}, {pipeline_mode = #tpu.pipeline_mode<synchronous>, transform_indices = @transform_5, window_bounds = array<i64: 2, 1, 32>}, {pipeline_mode = #tpu.pipeline_mode<synchronous>, transform_indices = @transform_6, window_bounds = array<i64: 2, 1, 32>}, {pipeline_mode = #tpu.pipeline_mode<synchronous>, transform_indices = @transform_7, window_bounds = array<i64: 32, 128>}, {pipeline_mode = #tpu.pipeline_mode<synchronous>, transform_indices = @transform_8, window_bounds = array<i64: 1, 128>}, {transform_indices = @transform_9, window_bounds = array<i64: 1, 1, 128>}]} {
    %c0 = arith.constant 0 : index
    %c0_0 = arith.constant 0 : index
    %c0_1 = arith.constant 0 : index
    %0 = vector.load %arg1[%c0, %c0_0, %c0_1] : memref<1x24x32xf32, #tpu.memory_space<vmem>>, vector<1x24x32xf32>
    %1 = vector.shape_cast %0 : vector<1x24x32xf32> to vector<24x32xf32>
    %c0_2 = arith.constant 0 : index
    %c0_3 = arith.constant 0 : index
    %2 = vector.load %arg2[%c0_2, %c0_3] : memref<1x32xf32, #tpu.memory_space<vmem>>, vector<1x32xf32>
    %c0_4 = arith.constant 0 : index
    %c0_5 = arith.constant 0 : index
    %3 = vector.load %arg3[%c0_4, %c0_5] : memref<1x32xf32, #tpu.memory_space<vmem>>, vector<1x32xf32>
    %cst = arith.constant dense<0.000000e+00> : vector<24xf32>
    %4 = vector.multi_reduction <add>, %1, %cst [1] : vector<24x32xf32> to vector<24xf32>
    %5 = vector.shape_cast %4 : vector<24xf32> to vector<24x1xf32>
    %cst_6 = arith.constant 3.200000e+01 : f32
    %6 = vector.broadcast %cst_6 : f32 to vector<24x1xf32>
    %7 = arith.divf %5, %6 : vector<24x1xf32>
    %8 = vector.broadcast %7 : vector<24x1xf32> to vector<24x32xf32>
    %9 = arith.subf %1, %8 : vector<24x32xf32>
    %10 = arith.mulf %9, %9 : vector<24x32xf32>
    %cst_7 = arith.constant dense<0.000000e+00> : vector<24xf32>
    %11 = vector.multi_reduction <add>, %10, %cst_7 [1] : vector<24x32xf32> to vector<24xf32>
    %12 = vector.shape_cast %11 : vector<24xf32> to vector<24x1xf32>
    %cst_8 = arith.constant 3.200000e+01 : f32
    %13 = vector.broadcast %cst_8 : f32 to vector<24x1xf32>
    %14 = arith.divf %12, %13 : vector<24x1xf32>
    %15 = vector.broadcast %7 : vector<24x1xf32> to vector<24x32xf32>
    %16 = arith.subf %1, %15 : vector<24x32xf32>
    %cst_9 = arith.constant 9.99999974E-6 : f32
    %17 = vector.broadcast %cst_9 : f32 to vector<24x1xf32>
    %18 = arith.addf %14, %17 : vector<24x1xf32>
    %19 = math.rsqrt %18 : vector<24x1xf32>
    %20 = vector.broadcast %19 : vector<24x1xf32> to vector<24x32xf32>
    %21 = arith.mulf %16, %20 : vector<24x32xf32>
    %22 = vector.broadcast %2 : vector<1x32xf32> to vector<24x32xf32>
    %23 = arith.mulf %21, %22 : vector<24x32xf32>
    %24 = vector.broadcast %3 : vector<1x32xf32> to vector<24x32xf32>
    %25 = arith.addf %23, %24 : vector<24x32xf32>
    %26 = tpu.iota {dimensions = array<i32: 1>} : vector<24x24xi32>
    %c17_i32 = arith.constant 17 : i32
    %27 = vector.broadcast %c17_i32 : i32 to vector<24x24xi32>
    %28 = arith.cmpi slt, %26, %27 : vector<24x24xi32>
    %cst_10 = arith.constant 0.000000e+00 : f32
    %cst_11 = arith.constant -1.000000e+30 : f32
    %29 = vector.broadcast %cst_10 : f32 to vector<24x24xf32>
    %30 = vector.broadcast %cst_11 : f32 to vector<24x24xf32>
    %31 = arith.select %28, %29, %30 : vector<24x24xi1>, vector<24x24xf32>
    %c0_12 = arith.constant 0 : index
    %c0_13 = arith.constant 0 : index
    %c0_14 = arith.constant 0 : index
    %32 = vector.load %arg4[%c0_12, %c0_13, %c0_14] : memref<2x32x96xbf16, #tpu.memory_space<vmem>>, vector<1x32x96xbf16>
    %33 = vector.shape_cast %32 : vector<1x32x96xbf16> to vector<32x96xbf16>
    %c0_15 = arith.constant 0 : index
    %c0_16 = arith.constant 0 : index
    %c0_17 = arith.constant 0 : index
    %34 = vector.load %arg5[%c0_15, %c0_16, %c0_17] : memref<2x32x32xbf16, #tpu.memory_space<vmem>>, vector<1x32x32xbf16>
    %35 = vector.shape_cast %34 : vector<1x32x32xbf16> to vector<32x32xbf16>
    %36 = arith.truncf %25 : vector<24x32xf32> to vector<24x32xbf16>
    %cst_18 = arith.constant dense<0.000000e+00> : vector<24x96xf32>
    %37 = tpu.matmul %36, %33, %cst_18 {dimension_numbers = #tpu.dot_dimension_numbers<[1], [0], [0], [1], [0, 0, 1, 1], [], []>} : vector<24x32xbf16>, vector<32x96xbf16>, vector<24x96xf32> -> vector<24x96xf32>
    %38 = arith.truncf %37 : vector<24x96xf32> to vector<24x96xbf16>
    %39 = vector.shape_cast %38 : vector<24x96xbf16> to vector<1x24x96xbf16>
    %40 = vector.extract_strided_slice %39 {offsets = [0, 0, 0], sizes = [1, 24, 8], strides = [1, 1, 1]} : vector<1x24x96xbf16> to vector<1x24x8xbf16>
    %41 = vector.extract_strided_slice %39 {offsets = [0, 0, 32], sizes = [1, 24, 8], strides = [1, 1, 1]} : vector<1x24x96xbf16> to vector<1x24x8xbf16>
    %42 = vector.extract_strided_slice %39 {offsets = [0, 0, 64], sizes = [1, 24, 8], strides = [1, 1, 1]} : vector<1x24x96xbf16> to vector<1x24x8xbf16>
    "tpu.trace_start"() <{level = 10 : i32, message = "bid,bjd->bij"}> : () -> ()
    %cst_19 = arith.constant dense<0.000000e+00> : vector<1x24x24xf32>
    %43 = tpu.matmul %40, %41, %cst_19 {dimension_numbers = #tpu.dot_dimension_numbers<[2], [2], [1], [1], [0, 0, 0, 1, 1, 1], [0], [0]>} : vector<1x24x8xbf16>, vector<1x24x8xbf16>, vector<1x24x24xf32> -> vector<1x24x24xf32>
    "tpu.trace_stop"() : () -> ()
    %44 = vector.shape_cast %31 : vector<24x24xf32> to vector<1x24x24xf32>
    %45 = arith.addf %43, %44 : vector<1x24x24xf32>
    %cst_20 = arith.constant dense<0xFF800000> : vector<1x24xf32>
    %46 = vector.multi_reduction <maximumf>, %45, %cst_20 [2] : vector<1x24x24xf32> to vector<1x24xf32>
    %47 = vector.shape_cast %46 : vector<1x24xf32> to vector<1x24x1xf32>
    %48 = vector.broadcast %47 : vector<1x24x1xf32> to vector<1x24x24xf32>
    %49 = arith.subf %45, %48 : vector<1x24x24xf32>
    %50 = math.exp %49 : vector<1x24x24xf32>
    %cst_21 = arith.constant dense<0.000000e+00> : vector<1x24xf32>
    %51 = vector.multi_reduction <add>, %50, %cst_21 [2] : vector<1x24x24xf32> to vector<1x24xf32>
    %52 = vector.shape_cast %51 : vector<1x24xf32> to vector<1x24x1xf32>
    %53 = tpu.reciprocal %52 {approx = true} : vector<1x24x1xf32> -> vector<1x24x1xf32>
    %54 = vector.broadcast %53 : vector<1x24x1xf32> to vector<1x24x24xf32>
    %55 = arith.mulf %50, %54 : vector<1x24x24xf32>
    %56 = arith.truncf %55 : vector<1x24x24xf32> to vector<1x24x24xbf16>
    "tpu.trace_start"() <{level = 10 : i32, message = "bij,bjd->bid"}> : () -> ()
    %cst_22 = arith.constant dense<0.000000e+00> : vector<1x24x8xf32>
    %57 = tpu.matmul %56, %42, %cst_22 {dimension_numbers = #tpu.dot_dimension_numbers<[2], [1], [1], [2], [0, 0, 0, 1, 1, 2], [0], [0]>} : vector<1x24x24xbf16>, vector<1x24x8xbf16>, vector<1x24x8xf32> -> vector<1x24x8xf32>
    "tpu.trace_stop"() : () -> ()
    %58 = vector.extract_strided_slice %39 {offsets = [0, 0, 8], sizes = [1, 24, 8], strides = [1, 1, 1]} : vector<1x24x96xbf16> to vector<1x24x8xbf16>
    %59 = vector.extract_strided_slice %39 {offsets = [0, 0, 40], sizes = [1, 24, 8], strides = [1, 1, 1]} : vector<1x24x96xbf16> to vector<1x24x8xbf16>
    %60 = vector.extract_strided_slice %39 {offsets = [0, 0, 72], sizes = [1, 24, 8], strides = [1, 1, 1]} : vector<1x24x96xbf16> to vector<1x24x8xbf16>
    "tpu.trace_start"() <{level = 10 : i32, message = "bid,bjd->bij"}> : () -> ()
    %cst_23 = arith.constant dense<0.000000e+00> : vector<1x24x24xf32>
    %61 = tpu.matmul %58, %59, %cst_23 {dimension_numbers = #tpu.dot_dimension_numbers<[2], [2], [1], [1], [0, 0, 0, 1, 1, 1], [0], [0]>} : vector<1x24x8xbf16>, vector<1x24x8xbf16>, vector<1x24x24xf32> -> vector<1x24x24xf32>
    "tpu.trace_stop"() : () -> ()
    %62 = vector.shape_cast %31 : vector<24x24xf32> to vector<1x24x24xf32>
    %63 = arith.addf %61, %62 : vector<1x24x24xf32>
    %cst_24 = arith.constant dense<0xFF800000> : vector<1x24xf32>
    %64 = vector.multi_reduction <maximumf>, %63, %cst_24 [2] : vector<1x24x24xf32> to vector<1x24xf32>
    %65 = vector.shape_cast %64 : vector<1x24xf32> to vector<1x24x1xf32>
    %66 = vector.broadcast %65 : vector<1x24x1xf32> to vector<1x24x24xf32>
    %67 = arith.subf %63, %66 : vector<1x24x24xf32>
    %68 = math.exp %67 : vector<1x24x24xf32>
    %cst_25 = arith.constant dense<0.000000e+00> : vector<1x24xf32>
    %69 = vector.multi_reduction <add>, %68, %cst_25 [2] : vector<1x24x24xf32> to vector<1x24xf32>
    %70 = vector.shape_cast %69 : vector<1x24xf32> to vector<1x24x1xf32>
    %71 = tpu.reciprocal %70 {approx = true} : vector<1x24x1xf32> -> vector<1x24x1xf32>
    %72 = vector.broadcast %71 : vector<1x24x1xf32> to vector<1x24x24xf32>
    %73 = arith.mulf %68, %72 : vector<1x24x24xf32>
    %74 = arith.truncf %73 : vector<1x24x24xf32> to vector<1x24x24xbf16>
    "tpu.trace_start"() <{level = 10 : i32, message = "bij,bjd->bid"}> : () -> ()
    %cst_26 = arith.constant dense<0.000000e+00> : vector<1x24x8xf32>
    %75 = tpu.matmul %74, %60, %cst_26 {dimension_numbers = #tpu.dot_dimension_numbers<[2], [1], [1], [2], [0, 0, 0, 1, 1, 2], [0], [0]>} : vector<1x24x24xbf16>, vector<1x24x8xbf16>, vector<1x24x8xf32> -> vector<1x24x8xf32>
    "tpu.trace_stop"() : () -> ()
    %76 = vector.extract_strided_slice %39 {offsets = [0, 0, 16], sizes = [1, 24, 8], strides = [1, 1, 1]} : vector<1x24x96xbf16> to vector<1x24x8xbf16>
    %77 = vector.extract_strided_slice %39 {offsets = [0, 0, 48], sizes = [1, 24, 8], strides = [1, 1, 1]} : vector<1x24x96xbf16> to vector<1x24x8xbf16>
    %78 = vector.extract_strided_slice %39 {offsets = [0, 0, 80], sizes = [1, 24, 8], strides = [1, 1, 1]} : vector<1x24x96xbf16> to vector<1x24x8xbf16>
    "tpu.trace_start"() <{level = 10 : i32, message = "bid,bjd->bij"}> : () -> ()
    %cst_27 = arith.constant dense<0.000000e+00> : vector<1x24x24xf32>
    %79 = tpu.matmul %76, %77, %cst_27 {dimension_numbers = #tpu.dot_dimension_numbers<[2], [2], [1], [1], [0, 0, 0, 1, 1, 1], [0], [0]>} : vector<1x24x8xbf16>, vector<1x24x8xbf16>, vector<1x24x24xf32> -> vector<1x24x24xf32>
    "tpu.trace_stop"() : () -> ()
    %80 = vector.shape_cast %31 : vector<24x24xf32> to vector<1x24x24xf32>
    %81 = arith.addf %79, %80 : vector<1x24x24xf32>
    %cst_28 = arith.constant dense<0xFF800000> : vector<1x24xf32>
    %82 = vector.multi_reduction <maximumf>, %81, %cst_28 [2] : vector<1x24x24xf32> to vector<1x24xf32>
    %83 = vector.shape_cast %82 : vector<1x24xf32> to vector<1x24x1xf32>
    %84 = vector.broadcast %83 : vector<1x24x1xf32> to vector<1x24x24xf32>
    %85 = arith.subf %81, %84 : vector<1x24x24xf32>
    %86 = math.exp %85 : vector<1x24x24xf32>
    %cst_29 = arith.constant dense<0.000000e+00> : vector<1x24xf32>
    %87 = vector.multi_reduction <add>, %86, %cst_29 [2] : vector<1x24x24xf32> to vector<1x24xf32>
    %88 = vector.shape_cast %87 : vector<1x24xf32> to vector<1x24x1xf32>
    %89 = tpu.reciprocal %88 {approx = true} : vector<1x24x1xf32> -> vector<1x24x1xf32>
    %90 = vector.broadcast %89 : vector<1x24x1xf32> to vector<1x24x24xf32>
    %91 = arith.mulf %86, %90 : vector<1x24x24xf32>
    %92 = arith.truncf %91 : vector<1x24x24xf32> to vector<1x24x24xbf16>
    "tpu.trace_start"() <{level = 10 : i32, message = "bij,bjd->bid"}> : () -> ()
    %cst_30 = arith.constant dense<0.000000e+00> : vector<1x24x8xf32>
    %93 = tpu.matmul %92, %78, %cst_30 {dimension_numbers = #tpu.dot_dimension_numbers<[2], [1], [1], [2], [0, 0, 0, 1, 1, 2], [0], [0]>} : vector<1x24x24xbf16>, vector<1x24x8xbf16>, vector<1x24x8xf32> -> vector<1x24x8xf32>
    "tpu.trace_stop"() : () -> ()
    %94 = vector.extract_strided_slice %39 {offsets = [0, 0, 24], sizes = [1, 24, 8], strides = [1, 1, 1]} : vector<1x24x96xbf16> to vector<1x24x8xbf16>
    %95 = vector.extract_strided_slice %39 {offsets = [0, 0, 56], sizes = [1, 24, 8], strides = [1, 1, 1]} : vector<1x24x96xbf16> to vector<1x24x8xbf16>
    %96 = vector.extract_strided_slice %39 {offsets = [0, 0, 88], sizes = [1, 24, 8], strides = [1, 1, 1]} : vector<1x24x96xbf16> to vector<1x24x8xbf16>
    "tpu.trace_start"() <{level = 10 : i32, message = "bid,bjd->bij"}> : () -> ()
    %cst_31 = arith.constant dense<0.000000e+00> : vector<1x24x24xf32>
    %97 = tpu.matmul %94, %95, %cst_31 {dimension_numbers = #tpu.dot_dimension_numbers<[2], [2], [1], [1], [0, 0, 0, 1, 1, 1], [0], [0]>} : vector<1x24x8xbf16>, vector<1x24x8xbf16>, vector<1x24x24xf32> -> vector<1x24x24xf32>
    "tpu.trace_stop"() : () -> ()
    %98 = vector.shape_cast %31 : vector<24x24xf32> to vector<1x24x24xf32>
    %99 = arith.addf %97, %98 : vector<1x24x24xf32>
    %cst_32 = arith.constant dense<0xFF800000> : vector<1x24xf32>
    %100 = vector.multi_reduction <maximumf>, %99, %cst_32 [2] : vector<1x24x24xf32> to vector<1x24xf32>
    %101 = vector.shape_cast %100 : vector<1x24xf32> to vector<1x24x1xf32>
    %102 = vector.broadcast %101 : vector<1x24x1xf32> to vector<1x24x24xf32>
    %103 = arith.subf %99, %102 : vector<1x24x24xf32>
    %104 = math.exp %103 : vector<1x24x24xf32>
    %cst_33 = arith.constant dense<0.000000e+00> : vector<1x24xf32>
    %105 = vector.multi_reduction <add>, %104, %cst_33 [2] : vector<1x24x24xf32> to vector<1x24xf32>
    %106 = vector.shape_cast %105 : vector<1x24xf32> to vector<1x24x1xf32>
    %107 = tpu.reciprocal %106 {approx = true} : vector<1x24x1xf32> -> vector<1x24x1xf32>
    %108 = vector.broadcast %107 : vector<1x24x1xf32> to vector<1x24x24xf32>
    %109 = arith.mulf %104, %108 : vector<1x24x24xf32>
    %110 = arith.truncf %109 : vector<1x24x24xf32> to vector<1x24x24xbf16>
    "tpu.trace_start"() <{level = 10 : i32, message = "bij,bjd->bid"}> : () -> ()
    %cst_34 = arith.constant dense<0.000000e+00> : vector<1x24x8xf32>
    %111 = tpu.matmul %110, %96, %cst_34 {dimension_numbers = #tpu.dot_dimension_numbers<[2], [1], [1], [2], [0, 0, 0, 1, 1, 2], [0], [0]>} : vector<1x24x24xbf16>, vector<1x24x8xbf16>, vector<1x24x8xf32> -> vector<1x24x8xf32>
    "tpu.trace_stop"() : () -> ()
    %112 = tpu.concatenate %57, %75, %93, %111 in 2 : vector<1x24x8xf32>, vector<1x24x8xf32>, vector<1x24x8xf32>, vector<1x24x8xf32> -> vector<1x24x32xf32>
    %113 = vector.shape_cast %112 : vector<1x24x32xf32> to vector<24x32xf32>
    %114 = arith.truncf %113 : vector<24x32xf32> to vector<24x32xbf16>
    %cst_35 = arith.constant dense<0.000000e+00> : vector<24x32xf32>
    %115 = tpu.matmul %114, %35, %cst_35 {dimension_numbers = #tpu.dot_dimension_numbers<[1], [0], [0], [1], [0, 0, 1, 1], [], []>} : vector<24x32xbf16>, vector<32x32xbf16>, vector<24x32xf32> -> vector<24x32xf32>
    %116 = arith.addf %25, %115 : vector<24x32xf32>
    %c0_36 = arith.constant 0 : index
    %c0_37 = arith.constant 0 : index
    %c0_38 = arith.constant 0 : index
    %117 = vector.load %arg6[%c0_36, %c0_37, %c0_38] : memref<2x1x32xf32, #tpu.memory_space<vmem>>, vector<1x1x32xf32>
    %118 = vector.shape_cast %117 : vector<1x1x32xf32> to vector<1x32xf32>
    %c0_39 = arith.constant 0 : index
    %c0_40 = arith.constant 0 : index
    %c0_41 = arith.constant 0 : index
    %119 = vector.load %arg7[%c0_39, %c0_40, %c0_41] : memref<2x1x32xf32, #tpu.memory_space<vmem>>, vector<1x1x32xf32>
    %120 = vector.shape_cast %119 : vector<1x1x32xf32> to vector<1x32xf32>
    %cst_42 = arith.constant dense<0.000000e+00> : vector<24xf32>
    %121 = vector.multi_reduction <add>, %116, %cst_42 [1] : vector<24x32xf32> to vector<24xf32>
    %122 = vector.shape_cast %121 : vector<24xf32> to vector<24x1xf32>
    %cst_43 = arith.constant 3.200000e+01 : f32
    %123 = vector.broadcast %cst_43 : f32 to vector<24x1xf32>
    %124 = arith.divf %122, %123 : vector<24x1xf32>
    %125 = vector.broadcast %124 : vector<24x1xf32> to vector<24x32xf32>
    %126 = arith.subf %116, %125 : vector<24x32xf32>
    %127 = arith.mulf %126, %126 : vector<24x32xf32>
    %cst_44 = arith.constant dense<0.000000e+00> : vector<24xf32>
    %128 = vector.multi_reduction <add>, %127, %cst_44 [1] : vector<24x32xf32> to vector<24xf32>
    %129 = vector.shape_cast %128 : vector<24xf32> to vector<24x1xf32>
    %cst_45 = arith.constant 3.200000e+01 : f32
    %130 = vector.broadcast %cst_45 : f32 to vector<24x1xf32>
    %131 = arith.divf %129, %130 : vector<24x1xf32>
    %132 = vector.broadcast %124 : vector<24x1xf32> to vector<24x32xf32>
    %133 = arith.subf %116, %132 : vector<24x32xf32>
    %cst_46 = arith.constant 9.99999974E-6 : f32
    %134 = vector.broadcast %cst_46 : f32 to vector<24x1xf32>
    %135 = arith.addf %131, %134 : vector<24x1xf32>
    %136 = math.rsqrt %135 : vector<24x1xf32>
    %137 = vector.broadcast %136 : vector<24x1xf32> to vector<24x32xf32>
    %138 = arith.mulf %133, %137 : vector<24x32xf32>
    %139 = vector.broadcast %118 : vector<1x32xf32> to vector<24x32xf32>
    %140 = arith.mulf %138, %139 : vector<24x32xf32>
    %141 = vector.broadcast %120 : vector<1x32xf32> to vector<24x32xf32>
    %142 = arith.addf %140, %141 : vector<24x32xf32>
    %c1 = arith.constant 1 : index
    %c0_47 = arith.constant 0 : index
    %c0_48 = arith.constant 0 : index
    %143 = vector.load %arg4[%c1, %c0_47, %c0_48] : memref<2x32x96xbf16, #tpu.memory_space<vmem>>, vector<1x32x96xbf16>
    %144 = vector.shape_cast %143 : vector<1x32x96xbf16> to vector<32x96xbf16>
    %c1_49 = arith.constant 1 : index
    %c0_50 = arith.constant 0 : index
    %c0_51 = arith.constant 0 : index
    %145 = vector.load %arg5[%c1_49, %c0_50, %c0_51] : memref<2x32x32xbf16, #tpu.memory_space<vmem>>, vector<1x32x32xbf16>
    %146 = vector.shape_cast %145 : vector<1x32x32xbf16> to vector<32x32xbf16>
    %147 = arith.truncf %142 : vector<24x32xf32> to vector<24x32xbf16>
    %cst_52 = arith.constant dense<0.000000e+00> : vector<24x96xf32>
    %148 = tpu.matmul %147, %144, %cst_52 {dimension_numbers = #tpu.dot_dimension_numbers<[1], [0], [0], [1], [0, 0, 1, 1], [], []>} : vector<24x32xbf16>, vector<32x96xbf16>, vector<24x96xf32> -> vector<24x96xf32>
    %149 = arith.truncf %148 : vector<24x96xf32> to vector<24x96xbf16>
    %150 = vector.shape_cast %149 : vector<24x96xbf16> to vector<1x24x96xbf16>
    %151 = vector.extract_strided_slice %150 {offsets = [0, 0, 0], sizes = [1, 24, 8], strides = [1, 1, 1]} : vector<1x24x96xbf16> to vector<1x24x8xbf16>
    %152 = vector.extract_strided_slice %150 {offsets = [0, 0, 32], sizes = [1, 24, 8], strides = [1, 1, 1]} : vector<1x24x96xbf16> to vector<1x24x8xbf16>
    %153 = vector.extract_strided_slice %150 {offsets = [0, 0, 64], sizes = [1, 24, 8], strides = [1, 1, 1]} : vector<1x24x96xbf16> to vector<1x24x8xbf16>
    "tpu.trace_start"() <{level = 10 : i32, message = "bid,bjd->bij"}> : () -> ()
    %cst_53 = arith.constant dense<0.000000e+00> : vector<1x24x24xf32>
    %154 = tpu.matmul %151, %152, %cst_53 {dimension_numbers = #tpu.dot_dimension_numbers<[2], [2], [1], [1], [0, 0, 0, 1, 1, 1], [0], [0]>} : vector<1x24x8xbf16>, vector<1x24x8xbf16>, vector<1x24x24xf32> -> vector<1x24x24xf32>
    "tpu.trace_stop"() : () -> ()
    %155 = vector.shape_cast %31 : vector<24x24xf32> to vector<1x24x24xf32>
    %156 = arith.addf %154, %155 : vector<1x24x24xf32>
    %cst_54 = arith.constant dense<0xFF800000> : vector<1x24xf32>
    %157 = vector.multi_reduction <maximumf>, %156, %cst_54 [2] : vector<1x24x24xf32> to vector<1x24xf32>
    %158 = vector.shape_cast %157 : vector<1x24xf32> to vector<1x24x1xf32>
    %159 = vector.broadcast %158 : vector<1x24x1xf32> to vector<1x24x24xf32>
    %160 = arith.subf %156, %159 : vector<1x24x24xf32>
    %161 = math.exp %160 : vector<1x24x24xf32>
    %cst_55 = arith.constant dense<0.000000e+00> : vector<1x24xf32>
    %162 = vector.multi_reduction <add>, %161, %cst_55 [2] : vector<1x24x24xf32> to vector<1x24xf32>
    %163 = vector.shape_cast %162 : vector<1x24xf32> to vector<1x24x1xf32>
    %164 = tpu.reciprocal %163 {approx = true} : vector<1x24x1xf32> -> vector<1x24x1xf32>
    %165 = vector.broadcast %164 : vector<1x24x1xf32> to vector<1x24x24xf32>
    %166 = arith.mulf %161, %165 : vector<1x24x24xf32>
    %167 = arith.truncf %166 : vector<1x24x24xf32> to vector<1x24x24xbf16>
    "tpu.trace_start"() <{level = 10 : i32, message = "bij,bjd->bid"}> : () -> ()
    %cst_56 = arith.constant dense<0.000000e+00> : vector<1x24x8xf32>
    %168 = tpu.matmul %167, %153, %cst_56 {dimension_numbers = #tpu.dot_dimension_numbers<[2], [1], [1], [2], [0, 0, 0, 1, 1, 2], [0], [0]>} : vector<1x24x24xbf16>, vector<1x24x8xbf16>, vector<1x24x8xf32> -> vector<1x24x8xf32>
    "tpu.trace_stop"() : () -> ()
    %169 = vector.extract_strided_slice %150 {offsets = [0, 0, 8], sizes = [1, 24, 8], strides = [1, 1, 1]} : vector<1x24x96xbf16> to vector<1x24x8xbf16>
    %170 = vector.extract_strided_slice %150 {offsets = [0, 0, 40], sizes = [1, 24, 8], strides = [1, 1, 1]} : vector<1x24x96xbf16> to vector<1x24x8xbf16>
    %171 = vector.extract_strided_slice %150 {offsets = [0, 0, 72], sizes = [1, 24, 8], strides = [1, 1, 1]} : vector<1x24x96xbf16> to vector<1x24x8xbf16>
    "tpu.trace_start"() <{level = 10 : i32, message = "bid,bjd->bij"}> : () -> ()
    %cst_57 = arith.constant dense<0.000000e+00> : vector<1x24x24xf32>
    %172 = tpu.matmul %169, %170, %cst_57 {dimension_numbers = #tpu.dot_dimension_numbers<[2], [2], [1], [1], [0, 0, 0, 1, 1, 1], [0], [0]>} : vector<1x24x8xbf16>, vector<1x24x8xbf16>, vector<1x24x24xf32> -> vector<1x24x24xf32>
    "tpu.trace_stop"() : () -> ()
    %173 = vector.shape_cast %31 : vector<24x24xf32> to vector<1x24x24xf32>
    %174 = arith.addf %172, %173 : vector<1x24x24xf32>
    %cst_58 = arith.constant dense<0xFF800000> : vector<1x24xf32>
    %175 = vector.multi_reduction <maximumf>, %174, %cst_58 [2] : vector<1x24x24xf32> to vector<1x24xf32>
    %176 = vector.shape_cast %175 : vector<1x24xf32> to vector<1x24x1xf32>
    %177 = vector.broadcast %176 : vector<1x24x1xf32> to vector<1x24x24xf32>
    %178 = arith.subf %174, %177 : vector<1x24x24xf32>
    %179 = math.exp %178 : vector<1x24x24xf32>
    %cst_59 = arith.constant dense<0.000000e+00> : vector<1x24xf32>
    %180 = vector.multi_reduction <add>, %179, %cst_59 [2] : vector<1x24x24xf32> to vector<1x24xf32>
    %181 = vector.shape_cast %180 : vector<1x24xf32> to vector<1x24x1xf32>
    %182 = tpu.reciprocal %181 {approx = true} : vector<1x24x1xf32> -> vector<1x24x1xf32>
    %183 = vector.broadcast %182 : vector<1x24x1xf32> to vector<1x24x24xf32>
    %184 = arith.mulf %179, %183 : vector<1x24x24xf32>
    %185 = arith.truncf %184 : vector<1x24x24xf32> to vector<1x24x24xbf16>
    "tpu.trace_start"() <{level = 10 : i32, message = "bij,bjd->bid"}> : () -> ()
    %cst_60 = arith.constant dense<0.000000e+00> : vector<1x24x8xf32>
    %186 = tpu.matmul %185, %171, %cst_60 {dimension_numbers = #tpu.dot_dimension_numbers<[2], [1], [1], [2], [0, 0, 0, 1, 1, 2], [0], [0]>} : vector<1x24x24xbf16>, vector<1x24x8xbf16>, vector<1x24x8xf32> -> vector<1x24x8xf32>
    "tpu.trace_stop"() : () -> ()
    %187 = vector.extract_strided_slice %150 {offsets = [0, 0, 16], sizes = [1, 24, 8], strides = [1, 1, 1]} : vector<1x24x96xbf16> to vector<1x24x8xbf16>
    %188 = vector.extract_strided_slice %150 {offsets = [0, 0, 48], sizes = [1, 24, 8], strides = [1, 1, 1]} : vector<1x24x96xbf16> to vector<1x24x8xbf16>
    %189 = vector.extract_strided_slice %150 {offsets = [0, 0, 80], sizes = [1, 24, 8], strides = [1, 1, 1]} : vector<1x24x96xbf16> to vector<1x24x8xbf16>
    "tpu.trace_start"() <{level = 10 : i32, message = "bid,bjd->bij"}> : () -> ()
    %cst_61 = arith.constant dense<0.000000e+00> : vector<1x24x24xf32>
    %190 = tpu.matmul %187, %188, %cst_61 {dimension_numbers = #tpu.dot_dimension_numbers<[2], [2], [1], [1], [0, 0, 0, 1, 1, 1], [0], [0]>} : vector<1x24x8xbf16>, vector<1x24x8xbf16>, vector<1x24x24xf32> -> vector<1x24x24xf32>
    "tpu.trace_stop"() : () -> ()
    %191 = vector.shape_cast %31 : vector<24x24xf32> to vector<1x24x24xf32>
    %192 = arith.addf %190, %191 : vector<1x24x24xf32>
    %cst_62 = arith.constant dense<0xFF800000> : vector<1x24xf32>
    %193 = vector.multi_reduction <maximumf>, %192, %cst_62 [2] : vector<1x24x24xf32> to vector<1x24xf32>
    %194 = vector.shape_cast %193 : vector<1x24xf32> to vector<1x24x1xf32>
    %195 = vector.broadcast %194 : vector<1x24x1xf32> to vector<1x24x24xf32>
    %196 = arith.subf %192, %195 : vector<1x24x24xf32>
    %197 = math.exp %196 : vector<1x24x24xf32>
    %cst_63 = arith.constant dense<0.000000e+00> : vector<1x24xf32>
    %198 = vector.multi_reduction <add>, %197, %cst_63 [2] : vector<1x24x24xf32> to vector<1x24xf32>
    %199 = vector.shape_cast %198 : vector<1x24xf32> to vector<1x24x1xf32>
    %200 = tpu.reciprocal %199 {approx = true} : vector<1x24x1xf32> -> vector<1x24x1xf32>
    %201 = vector.broadcast %200 : vector<1x24x1xf32> to vector<1x24x24xf32>
    %202 = arith.mulf %197, %201 : vector<1x24x24xf32>
    %203 = arith.truncf %202 : vector<1x24x24xf32> to vector<1x24x24xbf16>
    "tpu.trace_start"() <{level = 10 : i32, message = "bij,bjd->bid"}> : () -> ()
    %cst_64 = arith.constant dense<0.000000e+00> : vector<1x24x8xf32>
    %204 = tpu.matmul %203, %189, %cst_64 {dimension_numbers = #tpu.dot_dimension_numbers<[2], [1], [1], [2], [0, 0, 0, 1, 1, 2], [0], [0]>} : vector<1x24x24xbf16>, vector<1x24x8xbf16>, vector<1x24x8xf32> -> vector<1x24x8xf32>
    "tpu.trace_stop"() : () -> ()
    %205 = vector.extract_strided_slice %150 {offsets = [0, 0, 24], sizes = [1, 24, 8], strides = [1, 1, 1]} : vector<1x24x96xbf16> to vector<1x24x8xbf16>
    %206 = vector.extract_strided_slice %150 {offsets = [0, 0, 56], sizes = [1, 24, 8], strides = [1, 1, 1]} : vector<1x24x96xbf16> to vector<1x24x8xbf16>
    %207 = vector.extract_strided_slice %150 {offsets = [0, 0, 88], sizes = [1, 24, 8], strides = [1, 1, 1]} : vector<1x24x96xbf16> to vector<1x24x8xbf16>
    "tpu.trace_start"() <{level = 10 : i32, message = "bid,bjd->bij"}> : () -> ()
    %cst_65 = arith.constant dense<0.000000e+00> : vector<1x24x24xf32>
    %208 = tpu.matmul %205, %206, %cst_65 {dimension_numbers = #tpu.dot_dimension_numbers<[2], [2], [1], [1], [0, 0, 0, 1, 1, 1], [0], [0]>} : vector<1x24x8xbf16>, vector<1x24x8xbf16>, vector<1x24x24xf32> -> vector<1x24x24xf32>
    "tpu.trace_stop"() : () -> ()
    %209 = vector.shape_cast %31 : vector<24x24xf32> to vector<1x24x24xf32>
    %210 = arith.addf %208, %209 : vector<1x24x24xf32>
    %cst_66 = arith.constant dense<0xFF800000> : vector<1x24xf32>
    %211 = vector.multi_reduction <maximumf>, %210, %cst_66 [2] : vector<1x24x24xf32> to vector<1x24xf32>
    %212 = vector.shape_cast %211 : vector<1x24xf32> to vector<1x24x1xf32>
    %213 = vector.broadcast %212 : vector<1x24x1xf32> to vector<1x24x24xf32>
    %214 = arith.subf %210, %213 : vector<1x24x24xf32>
    %215 = math.exp %214 : vector<1x24x24xf32>
    %cst_67 = arith.constant dense<0.000000e+00> : vector<1x24xf32>
    %216 = vector.multi_reduction <add>, %215, %cst_67 [2] : vector<1x24x24xf32> to vector<1x24xf32>
    %217 = vector.shape_cast %216 : vector<1x24xf32> to vector<1x24x1xf32>
    %218 = tpu.reciprocal %217 {approx = true} : vector<1x24x1xf32> -> vector<1x24x1xf32>
    %219 = vector.broadcast %218 : vector<1x24x1xf32> to vector<1x24x24xf32>
    %220 = arith.mulf %215, %219 : vector<1x24x24xf32>
    %221 = arith.truncf %220 : vector<1x24x24xf32> to vector<1x24x24xbf16>
    "tpu.trace_start"() <{level = 10 : i32, message = "bij,bjd->bid"}> : () -> ()
    %cst_68 = arith.constant dense<0.000000e+00> : vector<1x24x8xf32>
    %222 = tpu.matmul %221, %207, %cst_68 {dimension_numbers = #tpu.dot_dimension_numbers<[2], [1], [1], [2], [0, 0, 0, 1, 1, 2], [0], [0]>} : vector<1x24x24xbf16>, vector<1x24x8xbf16>, vector<1x24x8xf32> -> vector<1x24x8xf32>
    "tpu.trace_stop"() : () -> ()
    %223 = tpu.concatenate %168, %186, %204, %222 in 2 : vector<1x24x8xf32>, vector<1x24x8xf32>, vector<1x24x8xf32>, vector<1x24x8xf32> -> vector<1x24x32xf32>
    %224 = vector.shape_cast %223 : vector<1x24x32xf32> to vector<24x32xf32>
    %225 = arith.truncf %224 : vector<24x32xf32> to vector<24x32xbf16>
    %cst_69 = arith.constant dense<0.000000e+00> : vector<24x32xf32>
    %226 = tpu.matmul %225, %146, %cst_69 {dimension_numbers = #tpu.dot_dimension_numbers<[1], [0], [0], [1], [0, 0, 1, 1], [], []>} : vector<24x32xbf16>, vector<32x32xbf16>, vector<24x32xf32> -> vector<24x32xf32>
    %227 = arith.addf %142, %226 : vector<24x32xf32>
    %c1_70 = arith.constant 1 : index
    %c0_71 = arith.constant 0 : index
    %c0_72 = arith.constant 0 : index
    %228 = vector.load %arg6[%c1_70, %c0_71, %c0_72] : memref<2x1x32xf32, #tpu.memory_space<vmem>>, vector<1x1x32xf32>
    %229 = vector.shape_cast %228 : vector<1x1x32xf32> to vector<1x32xf32>
    %c1_73 = arith.constant 1 : index
    %c0_74 = arith.constant 0 : index
    %c0_75 = arith.constant 0 : index
    %230 = vector.load %arg7[%c1_73, %c0_74, %c0_75] : memref<2x1x32xf32, #tpu.memory_space<vmem>>, vector<1x1x32xf32>
    %231 = vector.shape_cast %230 : vector<1x1x32xf32> to vector<1x32xf32>
    %cst_76 = arith.constant dense<0.000000e+00> : vector<24xf32>
    %232 = vector.multi_reduction <add>, %227, %cst_76 [1] : vector<24x32xf32> to vector<24xf32>
    %233 = vector.shape_cast %232 : vector<24xf32> to vector<24x1xf32>
    %cst_77 = arith.constant 3.200000e+01 : f32
    %234 = vector.broadcast %cst_77 : f32 to vector<24x1xf32>
    %235 = arith.divf %233, %234 : vector<24x1xf32>
    %236 = vector.broadcast %235 : vector<24x1xf32> to vector<24x32xf32>
    %237 = arith.subf %227, %236 : vector<24x32xf32>
    %238 = arith.mulf %237, %237 : vector<24x32xf32>
    %cst_78 = arith.constant dense<0.000000e+00> : vector<24xf32>
    %239 = vector.multi_reduction <add>, %238, %cst_78 [1] : vector<24x32xf32> to vector<24xf32>
    %240 = vector.shape_cast %239 : vector<24xf32> to vector<24x1xf32>
    %cst_79 = arith.constant 3.200000e+01 : f32
    %241 = vector.broadcast %cst_79 : f32 to vector<24x1xf32>
    %242 = arith.divf %240, %241 : vector<24x1xf32>
    %243 = vector.broadcast %235 : vector<24x1xf32> to vector<24x32xf32>
    %244 = arith.subf %227, %243 : vector<24x32xf32>
    %cst_80 = arith.constant 9.99999974E-6 : f32
    %245 = vector.broadcast %cst_80 : f32 to vector<24x1xf32>
    %246 = arith.addf %242, %245 : vector<24x1xf32>
    %247 = math.rsqrt %246 : vector<24x1xf32>
    %248 = vector.broadcast %247 : vector<24x1xf32> to vector<24x32xf32>
    %249 = arith.mulf %244, %248 : vector<24x32xf32>
    %250 = vector.broadcast %229 : vector<1x32xf32> to vector<24x32xf32>
    %251 = arith.mulf %249, %250 : vector<24x32xf32>
    %252 = vector.broadcast %231 : vector<1x32xf32> to vector<24x32xf32>
    %253 = arith.addf %251, %252 : vector<24x32xf32>
    %254 = vector.shape_cast %253 : vector<24x32xf32> to vector<1x24x32xf32>
    %255 = vector.extract_strided_slice %254 {offsets = [0, 0, 0], sizes = [1, 1, 32], strides = [1, 1, 1]} : vector<1x24x32xf32> to vector<1x1x32xf32>
    %256 = vector.shape_cast %255 : vector<1x1x32xf32> to vector<1x32xf32>
    %257 = arith.truncf %256 : vector<1x32xf32> to vector<1x32xbf16>
    %c0_81 = arith.constant 0 : index
    %c0_82 = arith.constant 0 : index
    %258 = vector.load %arg8[%c0_81, %c0_82] : memref<32x128xbf16, #tpu.memory_space<vmem>>, vector<32x128xbf16>
    %cst_83 = arith.constant dense<0.000000e+00> : vector<1x128xf32>
    %259 = tpu.matmul %257, %258, %cst_83 {dimension_numbers = #tpu.dot_dimension_numbers<[1], [0], [0], [1], [0, 0, 1, 1], [], []>} : vector<1x32xbf16>, vector<32x128xbf16>, vector<1x128xf32> -> vector<1x128xf32>
    %c0_84 = arith.constant 0 : index
    %c0_85 = arith.constant 0 : index
    %260 = vector.load %arg9[%c0_84, %c0_85] : memref<1x128xf32, #tpu.memory_space<vmem>>, vector<1x128xf32>
    %261 = arith.addf %259, %260 : vector<1x128xf32>
    %c0_86 = arith.constant 0 : index
    %c0_87 = arith.constant 0 : index
    %c0_88 = arith.constant 0 : index
    %262 = vector.load %arg10[%c0_86, %c0_87, %c0_88] : memref<1x1x128xf32, #tpu.memory_space<vmem>>, vector<1x1x128xf32>
    %263 = vector.shape_cast %262 : vector<1x1x128xf32> to vector<1x128xf32>
    %264 = vector.shape_cast %261 : vector<1x128xf32> to vector<1x1x128xf32>
    tpu.vector_store %arg10[%c0_86, %c0_87, %c0_88], %264 {strides = array<i32>} : memref<1x1x128xf32, #tpu.memory_space<vmem>>, vector<1x1x128xf32>,
    return
  }
  func.func @transform_0(%arg0: i32) -> (i32, i32, i32) {
    %c0_i32 = arith.constant 0 : i32
    %c0_i32_0 = arith.constant 0 : i32
    %c0_i32_1 = arith.constant 0 : i32
    return %arg0, %c0_i32, %c0_i32_0 : i32, i32, i32
  }
  func.func @transform_1(%arg0: i32) -> (i32, i32) {
    %c0_i32 = arith.constant 0 : i32
    %c0_i32_0 = arith.constant 0 : i32
    %c0_i32_1 = arith.constant 0 : i32
    return %c0_i32, %c0_i32_0 : i32, i32
  }
  func.func @transform_2(%arg0: i32) -> (i32, i32) {
    %c0_i32 = arith.constant 0 : i32
    %c0_i32_0 = arith.constant 0 : i32
    %c0_i32_1 = arith.constant 0 : i32
    return %c0_i32, %c0_i32_0 : i32, i32
  }
  func.func @transform_3(%arg0: i32) -> (i32, i32, i32) {
    %c0_i32 = arith.constant 0 : i32
    %c0_i32_0 = arith.constant 0 : i32
    %c0_i32_1 = arith.constant 0 : i32
    %c0_i32_2 = arith.constant 0 : i32
    return %c0_i32, %c0_i32_0, %c0_i32_1 : i32, i32, i32
  }
  func.func @transform_4(%arg0: i32) -> (i32, i32, i32) {
    %c0_i32 = arith.constant 0 : i32
    %c0_i32_0 = arith.constant 0 : i32
    %c0_i32_1 = arith.constant 0 : i32
    %c0_i32_2 = arith.constant 0 : i32
    return %c0_i32, %c0_i32_0, %c0_i32_1 : i32, i32, i32
  }
  func.func @transform_5(%arg0: i32) -> (i32, i32, i32) {
    %c0_i32 = arith.constant 0 : i32
    %c0_i32_0 = arith.constant 0 : i32
    %c0_i32_1 = arith.constant 0 : i32
    %c0_i32_2 = arith.constant 0 : i32
    return %c0_i32, %c0_i32_0, %c0_i32_1 : i32, i32, i32
  }
  func.func @transform_6(%arg0: i32) -> (i32, i32, i32) {
    %c0_i32 = arith.constant 0 : i32
    %c0_i32_0 = arith.constant 0 : i32
    %c0_i32_1 = arith.constant 0 : i32
    %c0_i32_2 = arith.constant 0 : i32
    return %c0_i32, %c0_i32_0, %c0_i32_1 : i32, i32, i32
  }
  func.func @transform_7(%arg0: i32) -> (i32, i32) {
    %c0_i32 = arith.constant 0 : i32
    %c0_i32_0 = arith.constant 0 : i32
    %c0_i32_1 = arith.constant 0 : i32
    return %c0_i32, %c0_i32_0 : i32, i32
  }
  func.func @transform_8(%arg0: i32) -> (i32, i32) {
    %c0_i32 = arith.constant 0 : i32
    %c0_i32_0 = arith.constant 0 : i32
    %c0_i32_1 = arith.constant 0 : i32
    return %c0_i32, %c0_i32_0 : i32, i32
  }
  func.func @transform_9(%arg0: i32) -> (i32, i32, i32) {
    %c0_i32 = arith.constant 0 : i32
    %c0_i32_0 = arith.constant 0 : i32
    %c0_i32_1 = arith.constant 0 : i32
    return %arg0, %c0_i32, %c0_i32_0 : i32, i32, i32
  }
}

</mosaic_0001>

<llo_original>
// kernel: attention_classifier_forward.1
$region0: #{attention_classifier_forward.1}
  #allocation0 [shape = 'u32[]', space=smem, size = 0x4, offset = 0x4, fixed_abs, tag = 'smem constant byte address 0x4 - core index']
  #allocation1 [shape = 'u32[72,128]{1,0:T(1,128)}', space=vmem, size = 0x9000, scoped, tag = 'internal scratch']
  %s0 = inlined_call_operand.vmem [shape: f32[2,24,32], index: 0, kind: input, shape index: {}]
  %s1 = inlined_call_operand.vmem [shape: f32[1,32], index: 1, kind: input, shape index: {}]
  %s2 = inlined_call_operand.vmem [shape: f32[1,32], index: 2, kind: input, shape index: {}]
  %s3 = inlined_call_operand.vmem [shape: bf16[2,32,96], index: 3, kind: input, shape index: {}]
  %s4 = inlined_call_operand.vmem [shape: bf16[2,32,32], index: 4, kind: input, shape index: {}]
  %s5 = inlined_call_operand.vmem [shape: f32[2,1,32], index: 5, kind: input, shape index: {}]
  %s6 = inlined_call_operand.vmem [shape: f32[2,1,32], index: 6, kind: input, shape index: {}]
  %s7 = inlined_call_operand.vmem [shape: bf16[32,128], index: 7, kind: input, shape index: {}]
  %s8 = inlined_call_operand.vmem [shape: f32[1,128], index: 8, kind: input, shape index: {}]
  %s9 = inlined_call_operand.hbm [shape: f32[2,1,128], index: 9, kind: output, shape index: {}]
  %s10 = sld [smem:[#allocation0]]
  $region69: #{attention_classifier_forward.1} parent=0
    _
  %s12 = ssub.s32 1, %s10
  %s13 = scalar_select 0, %s12, %s10
  $region1: #{attention_classifier_forward.1} parent=0
    #allocation2 [shape = 'u8[1024]{0}', space=vmem, size = 0x400, scoped, tag = 'output window, operand 0']
    #allocation3 [shape = 's32[2]{0}', space=sflag, size = 0x8, scoped, tag = 'scoped memory for attention_classifier_forward.1']
    %14 = vsyncpa [#allocation3], 0
    %s15 = scalar_lea.sflag [#allocation3], 1
    %16 = vsyncpa %s15, 0
    loop: start=0, step=1, limit=4
    $region2: #{attention_classifier_forward.1} parent=1 // loop_pre_header
      _
    $region3: #{attention_classifier_forward.1} parent=1 // loop_header
      %s18 = sphi 0, %s22
      %p19 = scmp.ge.s32.totalorder %s18, 4
      %s28 = sphi 0, %s30
      %s31 = sphi 0, %s28
      %s32 = sphi 0, %s31
      %s48 = sphi 0, %s32
      %s52 = sphi 0, %s52
      %s54 = sphi 0, %s52
      %s55 = sphi 0, %s54
      %s69 = sphi 0, %s55
      %s73 = sphi 0, %s73
      %s75 = sphi 0, %s73
      %s76 = sphi 0, %s75
      %s90 = sphi 0, %s76
      %s94 = sphi 0, %s94
      %s96 = sphi 0, %s94
      %s97 = sphi 0, %s96
      %s111 = sphi 0, %s97
      %s115 = sphi 0, %s115
      %s117 = sphi 0, %s115
      %s118 = sphi 0, %s117
      %s132 = sphi 0, %s118
      %s136 = sphi 0, %s136
      %s138 = sphi 0, %s136
      %s139 = sphi 0, %s138
      %s153 = sphi 0, %s139
      %s157 = sphi 0, %s157
      %s159 = sphi 0, %s157
      %s160 = sphi 0, %s159
      %s174 = sphi 0, %s160
      %s178 = sphi 0, %s178
      %s180 = sphi 0, %s178
      %s181 = sphi 0, %s180
      %s195 = sphi 0, %s181
      %s199 = sphi 0, %s199
      %s201 = sphi 0, %s199
      %s202 = sphi 0, %s201
      %s216 = sphi 0, %s202
      %s222 = sphi 0, %s224
      %s225 = sphi 0, %s222
      %s226 = sphi 0, %s225
      %s242 = sphi 0, %s226
    $region4: #{attention_classifier_forward.1} parent=1 // loop_header_branch
      %21 = sbr.rel (%p19) target = $region8
    $region5: #{attention_classifier_forward.1} parent=1 // loop_body
      %s23 = ssub.s32 %s18, 1
      %s24 = ssub.s32 %s18, 2
      %s25 = sadd.s32 %s18, 1
      %s26 = ssub.s32 %s18, %s25
      %p27 = scmp.eq.s32.totalorder %s26, 0
      %s29 = sadd.s32 %s28, 1
      %s30 = scalar_select %p27, %s28, %s29
      %p33 = pneg %p27
      %p34 = scmp.eq.s32.totalorder %s18, 1
      %p35 = por %p33, %p34
      %p36 = scmp.ne.s32.totalorder %s28, %s31
      %p37 = scmp.eq.s32.totalorder %s18, 0
      %p38 = por %p36, %p37
      %p39 = scmp.ne.s32.totalorder %s28, %s31
      %p40 = scmp.eq.s32.totalorder %s23, 1
      %p41 = por %p39, %p40
      %p42 = scmp.ne.s32.totalorder %s31, %s32
      %p43 = scmp.eq.s32.totalorder %s23, 0
      %p44 = por %p42, %p43
      %p45 = scmp.ne.s32.totalorder %s31, %s32
      %p46 = scmp.eq.s32.totalorder %s24, 1
      %p47 = por %p45, %p46
      %p49 = scmp.ne.s32.totalorder %s32, %s48
      %p50 = scmp.eq.s32.totalorder %s24, 0
      %p51 = por %p49, %p50
      %s53 = sadd.s32 %s52, 1
      %p56 = scmp.eq.s32.totalorder %s18, 1
      %p57 = scmp.ne.s32.totalorder %s52, %s54
      %p58 = scmp.eq.s32.totalorder %s18, 0
      %p59 = por %p57, %p58
      %p60 = scmp.ne.s32.totalorder %s52, %s54
      %p61 = scmp.eq.s32.totalorder %s23, 1
      %p62 = por %p60, %p61
      %p63 = scmp.ne.s32.totalorder %s54, %s55
      %p64 = scmp.eq.s32.totalorder %s23, 0
      %p65 = por %p63, %p64
      %p66 = scmp.ne.s32.totalorder %s54, %s55
      %p67 = scmp.eq.s32.totalorder %s24, 1
      %p68 = por %p66, %p67
      %p70 = scmp.ne.s32.totalorder %s55, %s69
      %p71 = scmp.eq.s32.totalorder %s24, 0
      %p72 = por %p70, %p71
      %s74 = sadd.s32 %s73, 1
      %p77 = scmp.eq.s32.totalorder %s18, 1
      %p78 = scmp.ne.s32.totalorder %s73, %s75
      %p79 = scmp.eq.s32.totalorder %s18, 0
      %p80 = por %p78, %p79
      %p81 = scmp.ne.s32.totalorder %s73, %s75
      %p82 = scmp.eq.s32.totalorder %s23, 1
      %p83 = por %p81, %p82
      %p84 = scmp.ne.s32.totalorder %s75, %s76
      %p85 = scmp.eq.s32.totalorder %s23, 0
      %p86 = por %p84, %p85
      %p87 = scmp.ne.s32.totalorder %s75, %s76
      %p88 = scmp.eq.s32.totalorder %s24, 1
      %p89 = por %p87, %p88
      %p91 = scmp.ne.s32.totalorder %s76, %s90
      %p92 = scmp.eq.s32.totalorder %s24, 0
      %p93 = por %p91, %p92
      %s95 = sadd.s32 %s94, 1
      %p98 = scmp.eq.s32.totalorder %s18, 1
      %p99 = scmp.ne.s32.totalorder %s94, %s96
      %p100 = scmp.eq.s32.totalorder %s18, 0
      %p101 = por %p99, %p100
      %p102 = scmp.ne.s32.totalorder %s94, %s96
      %p103 = scmp.eq.s32.totalorder %s23, 1
      %p104 = por %p102, %p103
      %p105 = scmp.ne.s32.totalorder %s96, %s97
      %p106 = scmp.eq.s32.totalorder %s23, 0
      %p107 = por %p105, %p106
      %p108 = scmp.ne.s32.totalorder %s96, %s97
      %p109 = scmp.eq.s32.totalorder %s24, 1
      %p110 = por %p108, %p109
      %p112 = scmp.ne.s32.totalorder %s97, %s111
      %p113 = scmp.eq.s32.totalorder %s24, 0
      %p114 = por %p112, %p113
      %s116 = sadd.s32 %s115, 1
      %p119 = scmp.eq.s32.totalorder %s18, 1
      %p120 = scmp.ne.s32.totalorder %s115, %s117
      %p121 = scmp.eq.s32.totalorder %s18, 0
      %p122 = por %p120, %p121
      %p123 = scmp.ne.s32.totalorder %s115, %s117
      %p124 = scmp.eq.s32.totalorder %s23, 1
      %p125 = por %p123, %p124
      %p126 = scmp.ne.s32.totalorder %s117, %s118
      %p127 = scmp.eq.s32.totalorder %s23, 0
      %p128 = por %p126, %p127
      %p129 = scmp.ne.s32.totalorder %s117, %s118
      %p130 = scmp.eq.s32.totalorder %s24, 1
      %p131 = por %p129, %p130
      %p133 = scmp.ne.s32.totalorder %s118, %s132
      %p134 = scmp.eq.s32.totalorder %s24, 0
      %p135 = por %p133, %p134
      %s137 = sadd.s32 %s136, 1
      %p140 = scmp.eq.s32.totalorder %s18, 1
      %p141 = scmp.ne.s32.totalorder %s136, %s138
      %p142 = scmp.eq.s32.totalorder %s18, 0
      %p143 = por %p141, %p142
      %p144 = scmp.ne.s32.totalorder %s136, %s138
      %p145 = scmp.eq.s32.totalorder %s23, 1
      %p146 = por %p144, %p145
      %p147 = scmp.ne.s32.totalorder %s138, %s139
      %p148 = scmp.eq.s32.totalorder %s23, 0
      %p149 = por %p147, %p148
      %p150 = scmp.ne.s32.totalorder %s138, %s139
      %p151 = scmp.eq.s32.totalorder %s24, 1
      %p152 = por %p150, %p151
      %p154 = scmp.ne.s32.totalorder %s139, %s153
      %p155 = scmp.eq.s32.totalorder %s24, 0
      %p156 = por %p154, %p155
      %s158 = sadd.s32 %s157, 1
      %p161 = scmp.eq.s32.totalorder %s18, 1
      %p162 = scmp.ne.s32.totalorder %s157, %s159
      %p163 = scmp.eq.s32.totalorder %s18, 0
      %p164 = por %p162, %p163
      %p165 = scmp.ne.s32.totalorder %s157, %s159
      %p166 = scmp.eq.s32.totalorder %s23, 1
      %p167 = por %p165, %p166
      %p168 = scmp.ne.s32.totalorder %s159, %s160
      %p169 = scmp.eq.s32.totalorder %s23, 0
      %p170 = por %p168, %p169
      %p171 = scmp.ne.s32.totalorder %s159, %s160
      %p172 = scmp.eq.s32.totalorder %s24, 1
      %p173 = por %p171, %p172
      %p175 = scmp.ne.s32.totalorder %s160, %s174
      %p176 = scmp.eq.s32.totalorder %s24, 0
      %p177 = por %p175, %p176
      %s179 = sadd.s32 %s178, 1
      %p182 = scmp.eq.s32.totalorder %s18, 1
      %p183 = scmp.ne.s32.totalorder %s178, %s180
      %p184 = scmp.eq.s32.totalorder %s18, 0
      %p185 = por %p183, %p184
      %p186 = scmp.ne.s32.totalorder %s178, %s180
      %p187 = scmp.eq.s32.totalorder %s23, 1
      %p188 = por %p186, %p187
      %p189 = scmp.ne.s32.totalorder %s180, %s181
      %p190 = scmp.eq.s32.totalorder %s23, 0
      %p191 = por %p189, %p190
      %p192 = scmp.ne.s32.totalorder %s180, %s181
      %p193 = scmp.eq.s32.totalorder %s24, 1
      %p194 = por %p192, %p193
      %p196 = scmp.ne.s32.totalorder %s181, %s195
      %p197 = scmp.eq.s32.totalorder %s24, 0
      %p198 = por %p196, %p197
      %s200 = sadd.s32 %s199, 1
      %p203 = scmp.eq.s32.totalorder %s18, 1
      %p204 = scmp.ne.s32.totalorder %s199, %s201
      %p205 = scmp.eq.s32.totalorder %s18, 0
      %p206 = por %p204, %p205
      %p207 = scmp.ne.s32.totalorder %s199, %s201
      %p208 = scmp.eq.s32.totalorder %s23, 1
      %p209 = por %p207, %p208
      %p210 = scmp.ne.s32.totalorder %s201, %s202
      %p211 = scmp.eq.s32.totalorder %s23, 0
      %p212 = por %p210, %p211
      %p213 = scmp.ne.s32.totalorder %s201, %s202
      %p214 = scmp.eq.s32.totalorder %s24, 1
      %p215 = por %p213, %p214
      %p217 = scmp.ne.s32.totalorder %s202, %s216
      %p218 = scmp.eq.s32.totalorder %s24, 0
      %p219 = por %p217, %p218
      %s220 = ssub.s32 %s18, %s25
      %p221 = scmp.eq.s32.totalorder %s220, 0
      %s223 = sadd.s32 %s222, 1
      %s224 = scalar_select %p221, %s222, %s223
      %p227 = pneg %p221
      %p228 = scmp.eq.s32.totalorder %s18, 1
      %p229 = por %p227, %p228
      %p230 = scmp.ne.s32.totalorder %s222, %s225
      %p231 = scmp.eq.s32.totalorder %s18, 0
      %p232 = por %p230, %p231
      %p233 = scmp.ne.s32.totalorder %s222, %s225
      %p234 = scmp.eq.s32.totalorder %s23, 1
      %p235 = por %p233, %p234
      %p236 = scmp.ne.s32.totalorder %s225, %s226
      %p237 = scmp.eq.s32.totalorder %s23, 0
      %p238 = por %p236, %p237
      %p239 = scmp.ne.s32.totalorder %s225, %s226
      %p240 = scmp.eq.s32.totalorder %s24, 1
      %p241 = por %p239, %p240
      %p243 = scmp.ne.s32.totalorder %s226, %s242
      %p244 = scmp.eq.s32.totalorder %s24, 0
      %p245 = por %p243, %p244
      %p246 = scmp.le.s32.totalorder 1, %s18
      %p247 = scmp.lt.s32.totalorder %s18, 3
      %p248 = pnand %p246, %p247
      %p249 = pneg %p248
      // Predicated region
      $region9: #{attention_classifier_forward.1} parent=5 // pred_check
        _
      $region10: #{attention_classifier_forward.1} parent=5 // pred_check_branch
        %251 = sbr.rel (%p248) target = $region12
      $region11: #{attention_classifier_forward.1} parent=5 // pred_region
        %s252 = ssub.s32 %s18, 1
        // Predicated region
        $region13: #{attention_classifier_forward.1} parent=11 // pred_check
          %p253 = pneg %p65
        $region14: #{attention_classifier_forward.1} parent=11 // pred_check_branch
          %255 = sbr.rel (%p253) target = $region16
        $region15: #{attention_classifier_forward.1} parent=11 // pred_region
          _
        $region16: #{attention_classifier_forward.1} parent=11 // pred_fallthru
          _
        // Predicated region
        $region17: #{attention_classifier_forward.1} parent=11 // pred_check
          %p256 = pneg %p86
        $region18: #{attention_classifier_forward.1} parent=11 // pred_check_branch
          %258 = sbr.rel (%p256) target = $region20
        $region19: #{attention_classifier_forward.1} parent=11 // pred_region
          _
        $region20: #{attention_classifier_forward.1} parent=11 // pred_fallthru
          _
        // Predicated region
        $region21: #{attention_classifier_forward.1} parent=11 // pred_check
          %p259 = pneg %p107
        $region22: #{attention_classifier_forward.1} parent=11 // pred_check_branch
          %261 = sbr.rel (%p259) target = $region24
        $region23: #{attention_classifier_forward.1} parent=11 // pred_region
          _
        $region24: #{attention_classifier_forward.1} parent=11 // pred_fallthru
          _
        // Predicated region
        $region25: #{attention_classifier_forward.1} parent=11 // pred_check
          %p262 = pneg %p128
        $region26: #{attention_classifier_forward.1} parent=11 // pred_check_branch
          %264 = sbr.rel (%p262) target = $region28
        $region27: #{attention_classifier_forward.1} parent=11 // pred_region
          _
        $region28: #{attention_classifier_forward.1} parent=11 // pred_fallthru
          _
        // Predicated region
        $region29: #{attention_classifier_forward.1} parent=11 // pred_check
          %p265 = pneg %p149
        $region30: #{attention_classifier_forward.1} parent=11 // pred_check_branch
          %267 = sbr.rel (%p265) target = $region32
        $region31: #{attention_classifier_forward.1} parent=11 // pred_region
          _
        $region32: #{attention_classifier_forward.1} parent=11 // pred_fallthru
          _
        // Predicated region
        $region33: #{attention_classifier_forward.1} parent=11 // pred_check
          %p268 = pneg %p170
        $region34: #{attention_classifier_forward.1} parent=11 // pred_check_branch
          %270 = sbr.rel (%p268) target = $region36
        $region35: #{attention_classifier_forward.1} parent=11 // pred_region
          _
        $region36: #{attention_classifier_forward.1} parent=11 // pred_fallthru
          _
        // Predicated region
        $region37: #{attention_classifier_forward.1} parent=11 // pred_check
          %p271 = pneg %p191
        $region38: #{attention_classifier_forward.1} parent=11 // pred_check_branch
          %273 = sbr.rel (%p271) target = $region40
        $region39: #{attention_classifier_forward.1} parent=11 // pred_region
          _
        $region40: #{attention_classifier_forward.1} parent=11 // pred_fallthru
          _
        // Predicated region
        $region41: #{attention_classifier_forward.1} parent=11 // pred_check
          %p274 = pneg %p212
        $region42: #{attention_classifier_forward.1} parent=11 // pred_check_branch
          %276 = sbr.rel (%p274) target = $region44
        $region43: #{attention_classifier_forward.1} parent=11 // pred_region
          _
        $region44: #{attention_classifier_forward.1} parent=11 // pred_fallthru
          _
      $region12: #{attention_classifier_forward.1} parent=5 // pred_fallthru
        _
      %p277 = scmp.lt.s32.totalorder %s18, 2
      // Predicated region
      $region45: #{attention_classifier_forward.1} parent=5 // pred_check
        %p278 = pneg %p277
      $region46: #{attention_classifier_forward.1} parent=5 // pred_check_branch
        %280 = sbr.rel (%p278) target = $region48
      $region47: #{attention_classifier_forward.1} parent=5 // pred_region
        // Predicated region
        $region49: #{attention_classifier_forward.1} parent=47 // pred_check
          %p281 = pneg %p38
        $region50: #{attention_classifier_forward.1} parent=47 // pred_check_branch
          %283 = sbr.rel (%p281) target = $region52
        $region51: #{attention_classifier_forward.1} parent=47 // pred_region
          %p284 = scmp.lt.s32.totalorder %s18, 1
          %s285 = scalar_select %p284, %s18, 1
          %s286 = smul.addr %s285, 3
          %s287 = smul.addr %s286, 8
          %s288 = scalar_lea.vmem %s0, %s287
        $region52: #{attention_classifier_forward.1} parent=47 // pred_fallthru
          _
      $region48: #{attention_classifier_forward.1} parent=5 // pred_fallthru
        _
      %p289 = scmp.le.s32.totalorder 1, %s18
      %p290 = scmp.lt.s32.totalorder %s18, 3
      %p291 = pnand %p289, %p290
      %p292 = pneg %p291
      // Predicated region
      $region53: #{attention_classifier_forward.1} parent=5 // pred_check
        _
      $region54: #{attention_classifier_forward.1} parent=5 // pred_check_branch
        %294 = sbr.rel (%p291) target = $region56
      $region55: #{attention_classifier_forward.1} parent=5 // pred_region
        %s295 = ssub.s32 %s18, 1
        %p296 = scmp.lt.s32.totalorder %s23, 1
        %s297 = scalar_select %p296, %s23, 1
        %s298 = smul.addr %s297, 3
        %s299 = smul.addr %s298, 8
        %s300 = scalar_lea.vmem %s0, %s299
        %p301 = pneg %p44
        %p302 = pneg %p41
        %p303 = pneg %p65
        %p304 = pneg %p62
        %p305 = pneg %p86
        %p306 = pneg %p83
        %p307 = pneg %p107
        %p308 = pneg %p104
        %p309 = pneg %p128
        %p310 = pneg %p125
        %p311 = pneg %p149
        %p312 = pneg %p146
        %p313 = pneg %p170
        %p314 = pneg %p167
        %p315 = pneg %p191
        %p316 = pneg %p188
        %p317 = pneg %p212
        %p318 = pneg %p209
        %p319 = pneg %p238
        %p320 = pneg %p235
        %s321 = sand.u32 %s225, 1
        %s322 = scalar_lea.sflag [#allocation3], %s321
        %s323 = sand.u32 %s225, 1
        %s324 = scalar_lea.vmem [#allocation2], %s323
        %p325 = scmp.lt.s32.totalorder %s23, 1
        %s326 = scalar_select %p325, %s23, 1
        %s327 = smul.addr %s326, 3
        %s328 = smul.addr %s327, 8
        %s329 = scalar_lea.vmem %s0, %s328
        %v331 = vld [vmem:[%s329] sm:$0xff]
        %v332 = vld [vmem:[%s329 + $0x8] sm:$0xff]
        %v333 = vld [vmem:[%s329 + $0x10] sm:$0xff]
        %v334 = vld [vmem:[%s1] sm:$0x1]
        %v335 = vld [vmem:[%s2] sm:$0x1]
        %vm336 = vcmask 261120
        %v337 = vsel %vm336, %v331, 0.0
        %338 = vadd.xlane.f32.xlu0 %v337
        %v339 = vpop.xlane.xlu0 %338
        %v340 = vsel %vm336, %v332, 0.0
        %341 = vadd.xlane.f32.xlu0 %v340
        %v342 = vpop.xlane.xlu0 %341
        %v343 = vsel %vm336, %v333, 0.0
        %344 = vadd.xlane.f32.xlu0 %v343
        %v345 = vpop.xlane.xlu0 %344
        %v346 = vrcp.pop 32.0
        %v347 = vmul.f32 32.0, %v346
        %v348 = vsub.f32 1.0, %v347
        %v349 = vmul.f32 %v346, %v348
        %v350 = vadd.f32 %v346, %v349
        %vm351 = vweird.f32 %v346
        %v352 = vsel %vm351, %v346, %v350
        %v353 = vmul.f32 %v339, %v352
        %v354 = vmul.f32 %v342, %v352
        %v355 = vmul.f32 %v345, %v352
        %v356 = vsub.f32 %v331, %v353
        %v357 = vsub.f32 %v332, %v354
        %v358 = vsub.f32 %v333, %v355
        %v359 = vmul.f32 %v356, %v356
        %v360 = vmul.f32 %v357, %v357
        %v361 = vmul.f32 %v358, %v358
        %v362 = vsel %vm336, %v359, 0.0
        %363 = vadd.xlane.f32.xlu0 %v362
        %v364 = vpop.xlane.xlu0 %363
        %v365 = vsel %vm336, %v360, 0.0
        %366 = vadd.xlane.f32.xlu0 %v365
        %v367 = vpop.xlane.xlu0 %366
        %v368 = vsel %vm336, %v361, 0.0
        %369 = vadd.xlane.f32.xlu0 %v368
        %v370 = vpop.xlane.xlu0 %369
        %v371 = vmul.f32 %v364, %v352
        %v372 = vmul.f32 %v367, %v352
        %v373 = vmul.f32 %v370, %v352
        %v374 = vadd.f32 %v371, 1e-05
        %v375 = vadd.f32 %v372, 1e-05
        %v376 = vadd.f32 %v373, 1e-05
        %v377 = vrsqrt.pop %v374
        %v378 = vmul.f32 %v377, %v374
        %v379 = vmul.f32 %v378, %v377
        %v380 = vmul.f32 0.5, %v379
        %v381 = vsub.f32 1.5, %v380
        %v382 = vmul.f32 %v377, %v381
        %vm383 = vweird.f32 %v374
        %vm384 = vweird.f32 %v377
        %vm385 = vmor %vm383, %vm384
        %v386 = vsel %vm385, %v377, %v382
        %v387 = vrsqrt.pop %v375
        %v388 = vmul.f32 %v387, %v375
        %v389 = vmul.f32 %v388, %v387
        %v390 = vmul.f32 0.5, %v389
        %v391 = vsub.f32 1.5, %v390
        %v392 = vmul.f32 %v387, %v391
        %vm393 = vweird.f32 %v375
        %vm394 = vweird.f32 %v387
        %vm395 = vmor %vm393, %vm394
        %v396 = vsel %vm395, %v387, %v392
        %v397 = vrsqrt.pop %v376
        %v398 = vmul.f32 %v397, %v376
        %v399 = vmul.f32 %v398, %v397
        %v400 = vmul.f32 0.5, %v399
        %v401 = vsub.f32 1.5, %v400
        %v402 = vmul.f32 %v397, %v401
        %vm403 = vweird.f32 %v376
        %vm404 = vweird.f32 %v397
        %vm405 = vmor %vm403, %vm404
        %v406 = vsel %vm405, %v397, %v402
        %v407 = vmul.f32 %v356, %v386
        %v408 = vmul.f32 %v357, %v396
        %v409 = vmul.f32 %v358, %v406
        %v411 = vperm.slane %v334, 0
        %v413 = vmul.f32 %v407, %v411
        %v414 = vmul.f32 %v408, %v411
        %v415 = vmul.f32 %v409, %v411
        %v417 = vperm.slane %v335, 0
        %v419 = vadd.f32 %v413, %v417
        %v420 = vadd.f32 %v414, %v417
        %v421 = vadd.f32 %v415, %v417
        %v422 = vlaneseq
        %v423 = vand.u32 %v422, 127
        %vm424 = vcmp.lt.s32.totalorder %v423, 17
        %v425 = vsel %vm424, 0.0, -1e+30
        %v426 = vld [vmem:[%s3] sm:$0xf]
        %v427 = vld [vmem:[%s3 + $0x4] sm:$0xf]
        %v428 = vld [vmem:[%s3 + $0x8] sm:$0xf]
        %v429 = vld [vmem:[%s3 + $0xc] sm:$0xf]
        %v430 = vld [vmem:[%s4] sm:$0xf]
        %v431 = vld [vmem:[%s4 + $0x4] sm:$0xf]
        %v432 = vld [vmem:[%s4 + $0x8] sm:$0xf]
        %v433 = vld [vmem:[%s4 + $0xc] sm:$0xf]
        %v434 = vpack.c.bf16 %v420, %v419
        %v435 = vpack.c.bf16 %v421, %v421
        %v440 = vunpack.c.l.b16 %v426
        %v441 = vunpack.c.l.b16 %v427
        %v442 = vunpack.c.l.b16 %v428
        %v443 = vunpack.c.l.b16 %v429
        %v444 = vpack.c.b16 %v441, %v440
        %v445 = vpack.c.b16 %v443, %v442
        %v449 = vsel %vm336, %v434, 0
        %v452 = vsel %vm336, %v435, 0
        %454 = vmatpush.bf16.msra.mxu0 0
        %455 = vmatpush.bf16.msra.mxu0 0
        %456 = vmatpush.bf16.msra.mxu0 0
        %457 = vmatpush.bf16.msra.mxu0 0
        %458 = vmatpush.bf16.msra.mxu0 0
        %459 = vmatpush.bf16.msra.mxu0 0
        %460 = vmatpush.bf16.msra.mxu0 %v445
        %461 = vmatpush.bf16.msra.mxu0 %v444
        %462 = vmatmul.bf16.gmra.mxu0 %v449
        %v463 = vpop.f32.mrf.mxu0
        %v464 = vadd.f32 0.0, %v463
        %v465 = vpop.f32.mrf.mxu0
        %v466 = vadd.f32 0.0, %v465
        %467 = vmatmul.bf16.gmra.mxu0 %v452
        %v468 = vpop.f32.mrf.mxu0
        %v469 = vadd.f32 0.0, %v468
        %v470 = vpop.f32.mrf.mxu0
        %471 = vdwg.mxu0
        %v472 = vpack.c.bf16 %v464, %v464
        %v473 = vpack.c.bf16 %v466, %v466
        %v474 = vpack.c.bf16 %v469, %v469
        %v478 = vunpack.c.l.b16 %v472
        %v479 = vunpack.c.l.b16 %v473
        %v480 = vunpack.c.l.b16 %v474
        %v481 = vpack.c.b16 %v479, %v478
        %v482 = vpack.c.b16 %v480, %v480
        %483 = vrot.lane.b32.xlu0 %v481, 96
        %v484 = vpop.permute.xlu0 %483
        %485 = vrot.lane.b32.xlu0 %v482, 96
        %v486 = vpop.permute.xlu0 %485
        %vm487 = vcmask 64512
        %v489 = vsel %vm487, %v481, 0
        %v492 = vsel %vm487, %v482, 0
        %v495 = vsel %vm487, %v484, 0
        %v498 = vsel %vm487, %v486, 0
        %500 = vmatpush.bf16.xpose.msra.mxu0 0
        %501 = vmatpush.bf16.xpose.msra.mxu0 0
        %502 = vmatpush.bf16.xpose.msra.mxu0 0
        %503 = vmatpush.bf16.xpose.msra.mxu0 0
        %504 = vmatpush.bf16.xpose.msra.mxu0 0
        %505 = vmatpush.bf16.xpose.msra.mxu0 0
        %506 = vmatpush.bf16.xpose.msra.mxu0 %v498
        %507 = vmatpush.bf16.xpose.msra.mxu0 %v495
        %508 = vmatmul.bf16.gmra.mxu0 %v489
        %v509 = vpop.f32.mrf.mxu0
        %v510 = vadd.f32 %v425, %v509
        %v511 = vpop.f32.mrf.mxu0
        %v512 = vadd.f32 %v425, %v511
        %513 = vmatmul.bf16.gmra.mxu0 %v492
        %v514 = vpop.f32.mrf.mxu0
        %v515 = vadd.f32 %v425, %v514
        %v516 = vpop.f32.mrf.mxu0
        %517 = vdwg.mxu0
        %vm518 = vcmask 195584
        %v519 = vsel %vm518, %v510, -inf
        %520 = vmax.xlane.f32.xlu0 %v519
        %v521 = vpop.xlane.xlu0 %520
        %v522 = vsel %vm518, %v512, -inf
        %523 = vmax.xlane.f32.xlu0 %v522
        %v524 = vpop.xlane.xlu0 %523
        %v525 = vsel %vm518, %v515, -inf
        %526 = vmax.xlane.f32.xlu0 %v525
        %v527 = vpop.xlane.xlu0 %526
        %v528 = vsub.f32 %v510, %v521
        %v529 = vsub.f32 %v512, %v524
        %v530 = vsub.f32 %v515, %v527
        %v531 = vmul.f32 %v528, 1.442695
        %v532 = vpow.pop %v531
        %v533 = vmul.f32 %v529, 1.442695
        %v534 = vpow.pop %v533
        %v535 = vmul.f32 %v530, 1.442695
        %v536 = vpow.pop %v535
        %v537 = vsel %vm518, %v532, 0.0
        %538 = vadd.xlane.f32.xlu0 %v537
        %v539 = vpop.xlane.xlu0 %538
        %v540 = vsel %vm518, %v534, 0.0
        %541 = vadd.xlane.f32.xlu0 %v540
        %v542 = vpop.xlane.xlu0 %541
        %v543 = vsel %vm518, %v536, 0.0
        %544 = vadd.xlane.f32.xlu0 %v543
        %v545 = vpop.xlane.xlu0 %544
        %v546 = vrcp.pop %v539
        %v547 = vrcp.pop %v542
        %v548 = vrcp.pop %v545
        %v549 = vmul.f32 %v532, %v546
        %v550 = vmul.f32 %v534, %v547
        %v551 = vmul.f32 %v536, %v548
        %v552 = vpack.c.bf16 %v549, %v549
        %v553 = vpack.c.bf16 %v550, %v550
        %v554 = vpack.c.bf16 %v551, %v551
        %v558 = vunpack.c.l.b16 %v552
        %v559 = vunpack.c.l.b16 %v553
        %v560 = vunpack.c.l.b16 %v554
        %v561 = vpack.c.b16 %v559, %v558
        %v562 = vpack.c.b16 %v560, %v560
        %563 = vrot.lane.b32.xlu0 %v481, 64
        %v564 = vpop.permute.xlu0 %563
        %565 = vrot.lane.b32.xlu0 %v482, 64
        %v566 = vpop.permute.xlu0 %565
        %v569 = vsel %vm518, %v561, 0
        %v572 = vsel %vm518, %v562, 0
        %vm574 = vcmask 1043456
        %v576 = vsel %vm574, %v566, 0
        %578 = vmatpush.bf16.msra.mxu0 0
        %579 = vmatpush.bf16.msra.mxu0 0
        %580 = vmatpush.bf16.msra.mxu0 0
        %581 = vmatpush.bf16.msra.mxu0 0
        %582 = vmatpush.bf16.msra.mxu0 0
        %583 = vmatpush.bf16.msra.mxu0 0
        %584 = vmatpush.bf16.msra.mxu0 %v576
        %585 = vmatpush.bf16.msra.mxu0 %v564
        %586 = vmatmul.bf16.gmra.mxu0 %v569
        %v587 = vpop.f32.mrf.mxu0
        %v588 = vadd.f32 0.0, %v587
        %v589 = vpop.f32.mrf.mxu0
        %v590 = vadd.f32 0.0, %v589
        %591 = vmatmul.bf16.gmra.mxu0 %v572
        %v592 = vpop.f32.mrf.mxu0
        %v593 = vadd.f32 0.0, %v592
        %v594 = vpop.f32.mrf.mxu0
        %595 = vdwg.mxu0
        %596 = vrot.lane.b32.xlu0 %v481, 120
        %v597 = vpop.permute.xlu0 %596
        %598 = vrot.lane.b32.xlu0 %v482, 120
        %v599 = vpop.permute.xlu0 %598
        %600 = vrot.lane.b32.xlu0 %v481, 88
        %v601 = vpop.permute.xlu0 %600
        %602 = vrot.lane.b32.xlu0 %v482, 88
        %v603 = vpop.permute.xlu0 %602
        %v605 = vsel %vm487, %v597, 0
        %v608 = vsel %vm487, %v599, 0
        %v611 = vsel %vm487, %v601, 0
        %v614 = vsel %vm487, %v603, 0
        %616 = vmatpush.bf16.xpose.msra.mxu0 0
        %617 = vmatpush.bf16.xpose.msra.mxu0 0
        %618 = vmatpush.bf16.xpose.msra.mxu0 0
        %619 = vmatpush.bf16.xpose.msra.mxu0 0
        %620 = vmatpush.bf16.xpose.msra.mxu0 0
        %621 = vmatpush.bf16.xpose.msra.mxu0 0
        %622 = vmatpush.bf16.xpose.msra.mxu0 %v614
        %623 = vmatpush.bf16.xpose.msra.mxu0 %v611
        %624 = vmatmul.bf16.gmra.mxu0 %v605
        %v625 = vpop.f32.mrf.mxu0
        %v626 = vadd.f32 %v425, %v625
        %v627 = vpop.f32.mrf.mxu0
        %v628 = vadd.f32 %v425, %v627
        %629 = vmatmul.bf16.gmra.mxu0 %v608
        %v630 = vpop.f32.mrf.mxu0
        %v631 = vadd.f32 %v425, %v630
        %v632 = vpop.f32.mrf.mxu0
        %633 = vdwg.mxu0
        %v634 = vsel %vm518, %v626, -inf
        %635 = vmax.xlane.f32.xlu0 %v634
        %v636 = vpop.xlane.xlu0 %635
        %v637 = vsel %vm518, %v628, -inf
        %638 = vmax.xlane.f32.xlu0 %v637
        %v639 = vpop.xlane.xlu0 %638
        %v640 = vsel %vm518, %v631, -inf
        %641 = vmax.xlane.f32.xlu0 %v640
        %v642 = vpop.xlane.xlu0 %641
        %v643 = vsub.f32 %v626, %v636
        %v644 = vsub.f32 %v628, %v639
        %v645 = vsub.f32 %v631, %v642
        %v646 = vmul.f32 %v643, 1.442695
        %v647 = vpow.pop %v646
        %v648 = vmul.f32 %v644, 1.442695
        %v649 = vpow.pop %v648
        %v650 = vmul.f32 %v645, 1.442695
        %v651 = vpow.pop %v650
        %v652 = vsel %vm518, %v647, 0.0
        %653 = vadd.xlane.f32.xlu0 %v652
        %v654 = vpop.xlane.xlu0 %653
        %v655 = vsel %vm518, %v649, 0.0
        %656 = vadd.xlane.f32.xlu0 %v655
        %v657 = vpop.xlane.xlu0 %656
        %v658 = vsel %vm518, %v651, 0.0
        %659 = vadd.xlane.f32.xlu0 %v658
        %v660 = vpop.xlane.xlu0 %659
        %v661 = vrcp.pop %v654
        %v662 = vrcp.pop %v657
        %v663 = vrcp.pop %v660
        %v664 = vmul.f32 %v647, %v661
        %v665 = vmul.f32 %v649, %v662
        %v666 = vmul.f32 %v651, %v663
        %v667 = vpack.c.bf16 %v664, %v664
        %v668 = vpack.c.bf16 %v665, %v665
        %v669 = vpack.c.bf16 %v666, %v666
        %v673 = vunpack.c.l.b16 %v667
        %v674 = vunpack.c.l.b16 %v668
        %v675 = vunpack.c.l.b16 %v669
        %v676 = vpack.c.b16 %v674, %v673
        %v677 = vpack.c.b16 %v675, %v675
        %678 = vrot.lane.b32.xlu0 %v481, 56
        %v679 = vpop.permute.xlu0 %678
        %680 = vrot.lane.b32.xlu0 %v482, 56
        %v681 = vpop.permute.xlu0 %680
        %v684 = vsel %vm518, %v676, 0
        %v687 = vsel %vm518, %v677, 0
        %v690 = vsel %vm574, %v681, 0
        %692 = vmatpush.bf16.msra.mxu0 0
        %693 = vmatpush.bf16.msra.mxu0 0
        %694 = vmatpush.bf16.msra.mxu0 0
        %695 = vmatpush.bf16.msra.mxu0 0
        %696 = vmatpush.bf16.msra.mxu0 0
        %697 = vmatpush.bf16.msra.mxu0 0
        %698 = vmatpush.bf16.msra.mxu0 %v690
        %699 = vmatpush.bf16.msra.mxu0 %v679
        %700 = vmatmul.bf16.gmra.mxu0 %v684
        %v701 = vpop.f32.mrf.mxu0
        %v702 = vadd.f32 0.0, %v701
        %v703 = vpop.f32.mrf.mxu0
        %v704 = vadd.f32 0.0, %v703
        %705 = vmatmul.bf16.gmra.mxu0 %v687
        %v706 = vpop.f32.mrf.mxu0
        %v707 = vadd.f32 0.0, %v706
        %v708 = vpop.f32.mrf.mxu0
        %709 = vdwg.mxu0
        %710 = vrot.lane.b32.xlu0 %v481, 112
        %v711 = vpop.permute.xlu0 %710
        %712 = vrot.lane.b32.xlu0 %v482, 112
        %v713 = vpop.permute.xlu0 %712
        %714 = vrot.lane.b32.xlu0 %v481, 80
        %v715 = vpop.permute.xlu0 %714
        %716 = vrot.lane.b32.xlu0 %v482, 80
        %v717 = vpop.permute.xlu0 %716
        %v719 = vsel %vm487, %v711, 0
        %v722 = vsel %vm487, %v713, 0
        %v725 = vsel %vm487, %v715, 0
        %v728 = vsel %vm487, %v717, 0
        %730 = vmatpush.bf16.xpose.msra.mxu0 0
        %731 = vmatpush.bf16.xpose.msra.mxu0 0
        %732 = vmatpush.bf16.xpose.msra.mxu0 0
        %733 = vmatpush.bf16.xpose.msra.mxu0 0
        %734 = vmatpush.bf16.xpose.msra.mxu0 0
        %735 = vmatpush.bf16.xpose.msra.mxu0 0
        %736 = vmatpush.bf16.xpose.msra.mxu0 %v728
        %737 = vmatpush.bf16.xpose.msra.mxu0 %v725
        %738 = vmatmul.bf16.gmra.mxu0 %v719
        %v739 = vpop.f32.mrf.mxu0
        %v740 = vadd.f32 %v425, %v739
        %v741 = vpop.f32.mrf.mxu0
        %v742 = vadd.f32 %v425, %v741
        %743 = vmatmul.bf16.gmra.mxu0 %v722
        %v744 = vpop.f32.mrf.mxu0
        %v745 = vadd.f32 %v425, %v744
        %v746 = vpop.f32.mrf.mxu0
        %747 = vdwg.mxu0
        %v748 = vsel %vm518, %v740, -inf
        %749 = vmax.xlane.f32.xlu0 %v748
        %v750 = vpop.xlane.xlu0 %749
        %v751 = vsel %vm518, %v742, -inf
        %752 = vmax.xlane.f32.xlu0 %v751
        %v753 = vpop.xlane.xlu0 %752
        %v754 = vsel %vm518, %v745, -inf
        %755 = vmax.xlane.f32.xlu0 %v754
        %v756 = vpop.xlane.xlu0 %755
        %v757 = vsub.f32 %v740, %v750
        %v758 = vsub.f32 %v742, %v753
        %v759 = vsub.f32 %v745, %v756
        %v760 = vmul.f32 %v757, 1.442695
        %v761 = vpow.pop %v760
        %v762 = vmul.f32 %v758, 1.442695
        %v763 = vpow.pop %v762
        %v764 = vmul.f32 %v759, 1.442695
        %v765 = vpow.pop %v764
        %v766 = vsel %vm518, %v761, 0.0
        %767 = vadd.xlane.f32.xlu0 %v766
        %v768 = vpop.xlane.xlu0 %767
        %v769 = vsel %vm518, %v763, 0.0
        %770 = vadd.xlane.f32.xlu0 %v769
        %v771 = vpop.xlane.xlu0 %770
        %v772 = vsel %vm518, %v765, 0.0
        %773 = vadd.xlane.f32.xlu0 %v772
        %v774 = vpop.xlane.xlu0 %773
        %v775 = vrcp.pop %v768
        %v776 = vrcp.pop %v771
        %v777 = vrcp.pop %v774
        %v778 = vmul.f32 %v761, %v775
        %v779 = vmul.f32 %v763, %v776
        %v780 = vmul.f32 %v765, %v777
        %v781 = vpack.c.bf16 %v778, %v778
        %v782 = vpack.c.bf16 %v779, %v779
        %v783 = vpack.c.bf16 %v780, %v780
        %v787 = vunpack.c.l.b16 %v781
        %v788 = vunpack.c.l.b16 %v782
        %v789 = vunpack.c.l.b16 %v783
        %v790 = vpack.c.b16 %v788, %v787
        %v791 = vpack.c.b16 %v789, %v789
        %792 = vrot.lane.b32.xlu0 %v481, 48
        %v793 = vpop.permute.xlu0 %792
        %794 = vrot.lane.b32.xlu0 %v482, 48
        %v795 = vpop.permute.xlu0 %794
        %v798 = vsel %vm518, %v790, 0
        %v801 = vsel %vm518, %v791, 0
        %v804 = vsel %vm574, %v795, 0
        %806 = vmatpush.bf16.msra.mxu0 0
        %807 = vmatpush.bf16.msra.mxu0 0
        %808 = vmatpush.bf16.msra.mxu0 0
        %809 = vmatpush.bf16.msra.mxu0 0
        %810 = vmatpush.bf16.msra.mxu0 0
        %811 = vmatpush.bf16.msra.mxu0 0
        %812 = vmatpush.bf16.msra.mxu0 %v804
        %813 = vmatpush.bf16.msra.mxu0 %v793
        %814 = vmatmul.bf16.gmra.mxu0 %v798
        %v815 = vpop.f32.mrf.mxu0
        %v816 = vadd.f32 0.0, %v815
        %v817 = vpop.f32.mrf.mxu0
        %v818 = vadd.f32 0.0, %v817
        %819 = vmatmul.bf16.gmra.mxu0 %v801
        %v820 = vpop.f32.mrf.mxu0
        %v821 = vadd.f32 0.0, %v820
        %v822 = vpop.f32.mrf.mxu0
        %823 = vdwg.mxu0
        %824 = vrot.lane.b32.xlu0 %v481, 104
        %v825 = vpop.permute.xlu0 %824
        %826 = vrot.lane.b32.xlu0 %v482, 104
        %v827 = vpop.permute.xlu0 %826
        %828 = vrot.lane.b32.xlu0 %v481, 72
        %v829 = vpop.permute.xlu0 %828
        %830 = vrot.lane.b32.xlu0 %v482, 72
        %v831 = vpop.permute.xlu0 %830
        %v833 = vsel %vm487, %v825, 0
        %v836 = vsel %vm487, %v827, 0
        %v839 = vsel %vm487, %v829, 0
        %v842 = vsel %vm487, %v831, 0
        %844 = vmatpush.bf16.xpose.msra.mxu0 0
        %845 = vmatpush.bf16.xpose.msra.mxu0 0
        %846 = vmatpush.bf16.xpose.msra.mxu0 0
        %847 = vmatpush.bf16.xpose.msra.mxu0 0
        %848 = vmatpush.bf16.xpose.msra.mxu0 0
        %849 = vmatpush.bf16.xpose.msra.mxu0 0
        %850 = vmatpush.bf16.xpose.msra.mxu0 %v842
        %851 = vmatpush.bf16.xpose.msra.mxu0 %v839
        %852 = vmatmul.bf16.gmra.mxu0 %v833
        %v853 = vpop.f32.mrf.mxu0
        %v854 = vadd.f32 %v425, %v853
        %v855 = vpop.f32.mrf.mxu0
        %v856 = vadd.f32 %v425, %v855
        %857 = vmatmul.bf16.gmra.mxu0 %v836
        %v858 = vpop.f32.mrf.mxu0
        %v859 = vadd.f32 %v425, %v858
        %v860 = vpop.f32.mrf.mxu0
        %861 = vdwg.mxu0
        %v862 = vsel %vm518, %v854, -inf
        %863 = vmax.xlane.f32.xlu0 %v862
        %v864 = vpop.xlane.xlu0 %863
        %v865 = vsel %vm518, %v856, -inf
        %866 = vmax.xlane.f32.xlu0 %v865
        %v867 = vpop.xlane.xlu0 %866
        %v868 = vsel %vm518, %v859, -inf
        %869 = vmax.xlane.f32.xlu0 %v868
        %v870 = vpop.xlane.xlu0 %869
        %v871 = vsub.f32 %v854, %v864
        %v872 = vsub.f32 %v856, %v867
        %v873 = vsub.f32 %v859, %v870
        %v874 = vmul.f32 %v871, 1.442695
        %v875 = vpow.pop %v874
        %v876 = vmul.f32 %v872, 1.442695
        %v877 = vpow.pop %v876
        %v878 = vmul.f32 %v873, 1.442695
        %v879 = vpow.pop %v878
        %v880 = vsel %vm518, %v875, 0.0
        %881 = vadd.xlane.f32.xlu0 %v880
        %v882 = vpop.xlane.xlu0 %881
        %v883 = vsel %vm518, %v877, 0.0
        %884 = vadd.xlane.f32.xlu0 %v883
        %v885 = vpop.xlane.xlu0 %884
        %v886 = vsel %vm518, %v879, 0.0
        %887 = vadd.xlane.f32.xlu0 %v886
        %v888 = vpop.xlane.xlu0 %887
        %v889 = vrcp.pop %v882
        %v890 = vrcp.pop %v885
        %v891 = vrcp.pop %v888
        %v892 = vmul.f32 %v875, %v889
        %v893 = vmul.f32 %v877, %v890
        %v894 = vmul.f32 %v879, %v891
        %v895 = vpack.c.bf16 %v892, %v892
        %v896 = vpack.c.bf16 %v893, %v893
        %v897 = vpack.c.bf16 %v894, %v894
        %v901 = vunpack.c.l.b16 %v895
        %v902 = vunpack.c.l.b16 %v896
        %v903 = vunpack.c.l.b16 %v897
        %v904 = vpack.c.b16 %v902, %v901
        %v905 = vpack.c.b16 %v903, %v903
        %906 = vrot.lane.b32.xlu0 %v481, 40
        %v907 = vpop.permute.xlu0 %906
        %908 = vrot.lane.b32.xlu0 %v482, 40
        %v909 = vpop.permute.xlu0 %908
        %v912 = vsel %vm518, %v904, 0
        %v915 = vsel %vm518, %v905, 0
        %v918 = vsel %vm574, %v909, 0
        %920 = vmatpush.bf16.msra.mxu0 0
        %921 = vmatpush.bf16.msra.mxu0 0
        %922 = vmatpush.bf16.msra.mxu0 0
        %923 = vmatpush.bf16.msra.mxu0 0
        %924 = vmatpush.bf16.msra.mxu0 0
        %925 = vmatpush.bf16.msra.mxu0 0
        %926 = vmatpush.bf16.msra.mxu0 %v918
        %927 = vmatpush.bf16.msra.mxu0 %v907
        %928 = vmatmul.bf16.gmra.mxu0 %v912
        %v929 = vpop.f32.mrf.mxu0
        %v930 = vadd.f32 0.0, %v929
        %v931 = vpop.f32.mrf.mxu0
        %v932 = vadd.f32 0.0, %v931
        %933 = vmatmul.bf16.gmra.mxu0 %v915
        %v934 = vpop.f32.mrf.mxu0
        %v935 = vadd.f32 0.0, %v934
        %v936 = vpop.f32.mrf.mxu0
        %937 = vdwg.mxu0
        %941 = vrot.lane.b32.xlu0 %v702, 8
        %v942 = vpop.permute.xlu0 %941
        %943 = vrot.lane.b32.xlu0 %v704, 8
        %v944 = vpop.permute.xlu0 %943
        %945 = vrot.lane.b32.xlu0 %v707, 8
        %v946 = vpop.permute.xlu0 %945
        %953 = vrot.lane.b32.xlu0 %v816, 16
        %v954 = vpop.permute.xlu0 %953
        %955 = vrot.lane.b32.xlu0 %v818, 16
        %v956 = vpop.permute.xlu0 %955
        %957 = vrot.lane.b32.xlu0 %v821, 16
        %v958 = vpop.permute.xlu0 %957
        %965 = vrot.lane.b32.xlu0 %v930, 24
        %v966 = vpop.permute.xlu0 %965
        %967 = vrot.lane.b32.xlu0 %v932, 24
        %v968 = vpop.permute.xlu0 %967
        %969 = vrot.lane.b32.xlu0 %v935, 24
        %v970 = vpop.permute.xlu0 %969
        %v974 = vsel %vm487, %v588, %v942
        %v975 = vsel %vm487, %v590, %v944
        %v976 = vsel %vm487, %v593, %v946
        %vm977 = vcmask 130048
        %v978 = vsel %vm977, %v974, %v954
        %v979 = vsel %vm977, %v975, %v956
        %v980 = vsel %vm977, %v976, %v958
        %v981 = vsel %vm518, %v978, %v966
        %v982 = vsel %vm518, %v979, %v968
        %v983 = vsel %vm518, %v980, %v970
        %v984 = vpack.c.bf16 %v982, %v981
        %v985 = vpack.c.bf16 %v983, %v983
        %v990 = vunpack.c.l.b16 %v430
        %v991 = vunpack.c.l.b16 %v431
        %v992 = vunpack.c.l.b16 %v432
        %v993 = vunpack.c.l.b16 %v433
        %v994 = vpack.c.b16 %v991, %v990
        %v995 = vpack.c.b16 %v993, %v992
        %v999 = vsel %vm336, %v984, 0
        %v1002 = vsel %vm336, %v985, 0
        %1004 = vmatpush.bf16.msra.mxu0 0
        %1005 = vmatpush.bf16.msra.mxu0 0
        %1006 = vmatpush.bf16.msra.mxu0 0
        %1007 = vmatpush.bf16.msra.mxu0 0
        %1008 = vmatpush.bf16.msra.mxu0 0
        %1009 = vmatpush.bf16.msra.mxu0 0
        %1010 = vmatpush.bf16.msra.mxu0 %v995
        %1011 = vmatpush.bf16.msra.mxu0 %v994
        %1012 = vmatmul.bf16.gmra.mxu0 %v999
        %v1013 = vpop.f32.mrf.mxu0
        %v1014 = vadd.f32 0.0, %v1013
        %v1015 = vpop.f32.mrf.mxu0
        %v1016 = vadd.f32 0.0, %v1015
        %1017 = vmatmul.bf16.gmra.mxu0 %v1002
        %v1018 = vpop.f32.mrf.mxu0
        %v1019 = vadd.f32 0.0, %v1018
        %v1020 = vpop.f32.mrf.mxu0
        %1021 = vdwg.mxu0
        %v1022 = vadd.f32 %v419, %v1014
        %v1023 = vadd.f32 %v420, %v1016
        %v1024 = vadd.f32 %v421, %v1019
        %v1025 = vld [vmem:[%s5] sm:$0x1]
        %v1026 = vld [vmem:[%s6] sm:$0x1]
        %v1027 = vsel %vm336, %v1022, 0.0
        %1028 = vadd.xlane.f32.xlu0 %v1027
        %v1029 = vpop.xlane.xlu0 %1028
        %v1030 = vsel %vm336, %v1023, 0.0
        %1031 = vadd.xlane.f32.xlu0 %v1030
        %v1032 = vpop.xlane.xlu0 %1031
        %v1033 = vsel %vm336, %v1024, 0.0
        %1034 = vadd.xlane.f32.xlu0 %v1033
        %v1035 = vpop.xlane.xlu0 %1034
        %v1036 = vmul.f32 %v1029, %v352
        %v1037 = vmul.f32 %v1032, %v352
        %v1038 = vmul.f32 %v1035, %v352
        %v1039 = vsub.f32 %v1022, %v1036
        %v1040 = vsub.f32 %v1023, %v1037
        %v1041 = vsub.f32 %v1024, %v1038
        %v1042 = vmul.f32 %v1039, %v1039
        %v1043 = vmul.f32 %v1040, %v1040
        %v1044 = vmul.f32 %v1041, %v1041
        %v1045 = vsel %vm336, %v1042, 0.0
        %1046 = vadd.xlane.f32.xlu0 %v1045
        %v1047 = vpop.xlane.xlu0 %1046
        %v1048 = vsel %vm336, %v1043, 0.0
        %1049 = vadd.xlane.f32.xlu0 %v1048
        %v1050 = vpop.xlane.xlu0 %1049
        %v1051 = vsel %vm336, %v1044, 0.0
        %1052 = vadd.xlane.f32.xlu0 %v1051
        %v1053 = vpop.xlane.xlu0 %1052
        %v1054 = vmul.f32 %v1047, %v352
        %v1055 = vmul.f32 %v1050, %v352
        %v1056 = vmul.f32 %v1053, %v352
        %v1057 = vadd.f32 %v1054, 1e-05
        %v1058 = vadd.f32 %v1055, 1e-05
        %v1059 = vadd.f32 %v1056, 1e-05
        %v1060 = vrsqrt.pop %v1057
        %v1061 = vmul.f32 %v1060, %v1057
        %v1062 = vmul.f32 %v1061, %v1060
        %v1063 = vmul.f32 0.5, %v1062
        %v1064 = vsub.f32 1.5, %v1063
        %v1065 = vmul.f32 %v1060, %v1064
        %vm1066 = vweird.f32 %v1057
        %vm1067 = vweird.f32 %v1060
        %vm1068 = vmor %vm1066, %vm1067
        %v1069 = vsel %vm1068, %v1060, %v1065
        %v1070 = vrsqrt.pop %v1058
        %v1071 = vmul.f32 %v1070, %v1058
        %v1072 = vmul.f32 %v1071, %v1070
        %v1073 = vmul.f32 0.5, %v1072
        %v1074 = vsub.f32 1.5, %v1073
        %v1075 = vmul.f32 %v1070, %v1074
        %vm1076 = vweird.f32 %v1058
        %vm1077 = vweird.f32 %v1070
        %vm1078 = vmor %vm1076, %vm1077
        %v1079 = vsel %vm1078, %v1070, %v1075
        %v1080 = vrsqrt.pop %v1059
        %v1081 = vmul.f32 %v1080, %v1059
        %v1082 = vmul.f32 %v1081, %v1080
        %v1083 = vmul.f32 0.5, %v1082
        %v1084 = vsub.f32 1.5, %v1083
        %v1085 = vmul.f32 %v1080, %v1084
        %vm1086 = vweird.f32 %v1059
        %vm1087 = vweird.f32 %v1080
        %vm1088 = vmor %vm1086, %vm1087
        %v1089 = vsel %vm1088, %v1080, %v1085
        %v1090 = vmul.f32 %v1039, %v1069
        %v1091 = vmul.f32 %v1040, %v1079
        %v1092 = vmul.f32 %v1041, %v1089
        %v1094 = vperm.slane %v1025, 0
        %v1096 = vmul.f32 %v1090, %v1094
        %v1097 = vmul.f32 %v1091, %v1094
        %v1098 = vmul.f32 %v1092, %v1094
        %v1100 = vperm.slane %v1026, 0
        %v1102 = vadd.f32 %v1096, %v1100
        %v1103 = vadd.f32 %v1097, %v1100
        %v1104 = vadd.f32 %v1098, %v1100
        %s1105 = scalar_lea.vmem %s3, 16
        %v1106 = vld [vmem:[%s1105] sm:$0xf]
        %v1107 = vld [vmem:[%s1105 + $0x4] sm:$0xf]
        %v1108 = vld [vmem:[%s1105 + $0x8] sm:$0xf]
        %v1109 = vld [vmem:[%s1105 + $0xc] sm:$0xf]
        %s1110 = scalar_lea.vmem %s4, 16
        %v1111 = vld [vmem:[%s1110] sm:$0xf]
        %v1112 = vld [vmem:[%s1110 + $0x4] sm:$0xf]
        %v1113 = vld [vmem:[%s1110 + $0x8] sm:$0xf]
        %v1114 = vld [vmem:[%s1110 + $0xc] sm:$0xf]
        %v1115 = vpack.c.bf16 %v1103, %v1102
        %v1116 = vpack.c.bf16 %v1104, %v1104
        %v1121 = vunpack.c.l.b16 %v1106
        %v1122 = vunpack.c.l.b16 %v1107
        %v1123 = vunpack.c.l.b16 %v1108
        %v1124 = vunpack.c.l.b16 %v1109
        %v1125 = vpack.c.b16 %v1122, %v1121
        %v1126 = vpack.c.b16 %v1124, %v1123
        %v1130 = vsel %vm336, %v1115, 0
        %v1133 = vsel %vm336, %v1116, 0
        %1135 = vmatpush.bf16.msra.mxu0 0
        %1136 = vmatpush.bf16.msra.mxu0 0
        %1137 = vmatpush.bf16.msra.mxu0 0
        %1138 = vmatpush.bf16.msra.mxu0 0
        %1139 = vmatpush.bf16.msra.mxu0 0
        %1140 = vmatpush.bf16.msra.mxu0 0
        %1141 = vmatpush.bf16.msra.mxu0 %v1126
        %1142 = vmatpush.bf16.msra.mxu0 %v1125
        %1143 = vmatmul.bf16.gmra.mxu0 %v1130
        %v1144 = vpop.f32.mrf.mxu0
        %v1145 = vadd.f32 0.0, %v1144
        %v1146 = vpop.f32.mrf.mxu0
        %v1147 = vadd.f32 0.0, %v1146
        %1148 = vmatmul.bf16.gmra.mxu0 %v1133
        %v1149 = vpop.f32.mrf.mxu0
        %v1150 = vadd.f32 0.0, %v1149
        %v1151 = vpop.f32.mrf.mxu0
        %1152 = vdwg.mxu0
        %v1153 = vpack.c.bf16 %v1145, %v1145
        %v1154 = vpack.c.bf16 %v1147, %v1147
        %v1155 = vpack.c.bf16 %v1150, %v1150
        %v1159 = vunpack.c.l.b16 %v1153
        %v1160 = vunpack.c.l.b16 %v1154
        %v1161 = vunpack.c.l.b16 %v1155
        %v1162 = vpack.c.b16 %v1160, %v1159
        %v1163 = vpack.c.b16 %v1161, %v1161
        %1164 = vrot.lane.b32.xlu0 %v1162, 96
        %v1165 = vpop.permute.xlu0 %1164
        %1166 = vrot.lane.b32.xlu0 %v1163, 96
        %v1167 = vpop.permute.xlu0 %1166
        %v1169 = vsel %vm487, %v1162, 0
        %v1172 = vsel %vm487, %v1163, 0
        %v1175 = vsel %vm487, %v1165, 0
        %v1178 = vsel %vm487, %v1167, 0
        %1180 = vmatpush.bf16.xpose.msra.mxu0 0
        %1181 = vmatpush.bf16.xpose.msra.mxu0 0
        %1182 = vmatpush.bf16.xpose.msra.mxu0 0
        %1183 = vmatpush.bf16.xpose.msra.mxu0 0
        %1184 = vmatpush.bf16.xpose.msra.mxu0 0
        %1185 = vmatpush.bf16.xpose.msra.mxu0 0
        %1186 = vmatpush.bf16.xpose.msra.mxu0 %v1178
        %1187 = vmatpush.bf16.xpose.msra.mxu0 %v1175
        %1188 = vmatmul.bf16.gmra.mxu0 %v1169
        %v1189 = vpop.f32.mrf.mxu0
        %v1190 = vadd.f32 %v425, %v1189
        %v1191 = vpop.f32.mrf.mxu0
        %v1192 = vadd.f32 %v425, %v1191
        %1193 = vmatmul.bf16.gmra.mxu0 %v1172
        %v1194 = vpop.f32.mrf.mxu0
        %v1195 = vadd.f32 %v425, %v1194
        %v1196 = vpop.f32.mrf.mxu0
        %1197 = vdwg.mxu0
        %v1198 = vsel %vm518, %v1190, -inf
        %1199 = vmax.xlane.f32.xlu0 %v1198
        %v1200 = vpop.xlane.xlu0 %1199
        %v1201 = vsel %vm518, %v1192, -inf
        %1202 = vmax.xlane.f32.xlu0 %v1201
        %v1203 = vpop.xlane.xlu0 %1202
        %v1204 = vsel %vm518, %v1195, -inf
        %1205 = vmax.xlane.f32.xlu0 %v1204
        %v1206 = vpop.xlane.xlu0 %1205
        %v1207 = vsub.f32 %v1190, %v1200
        %v1208 = vsub.f32 %v1192, %v1203
        %v1209 = vsub.f32 %v1195, %v1206
        %v1210 = vmul.f32 %v1207, 1.442695
        %v1211 = vpow.pop %v1210
        %v1212 = vmul.f32 %v1208, 1.442695
        %v1213 = vpow.pop %v1212
        %v1214 = vmul.f32 %v1209, 1.442695
        %v1215 = vpow.pop %v1214
        %v1216 = vsel %vm518, %v1211, 0.0
        %1217 = vadd.xlane.f32.xlu0 %v1216
        %v1218 = vpop.xlane.xlu0 %1217
        %v1219 = vsel %vm518, %v1213, 0.0
        %1220 = vadd.xlane.f32.xlu0 %v1219
        %v1221 = vpop.xlane.xlu0 %1220
        %v1222 = vsel %vm518, %v1215, 0.0
        %1223 = vadd.xlane.f32.xlu0 %v1222
        %v1224 = vpop.xlane.xlu0 %1223
        %v1225 = vrcp.pop %v1218
        %v1226 = vrcp.pop %v1221
        %v1227 = vrcp.pop %v1224
        %v1228 = vmul.f32 %v1211, %v1225
        %v1229 = vmul.f32 %v1213, %v1226
        %v1230 = vmul.f32 %v1215, %v1227
        %v1231 = vpack.c.bf16 %v1228, %v1228
        %v1232 = vpack.c.bf16 %v1229, %v1229
        %v1233 = vpack.c.bf16 %v1230, %v1230
        %v1237 = vunpack.c.l.b16 %v1231
        %v1238 = vunpack.c.l.b16 %v1232
        %v1239 = vunpack.c.l.b16 %v1233
        %v1240 = vpack.c.b16 %v1238, %v1237
        %v1241 = vpack.c.b16 %v1239, %v1239
        %1242 = vrot.lane.b32.xlu0 %v1162, 64
        %v1243 = vpop.permute.xlu0 %1242
        %1244 = vrot.lane.b32.xlu0 %v1163, 64
        %v1245 = vpop.permute.xlu0 %1244
        %v1248 = vsel %vm518, %v1240, 0
        %v1251 = vsel %vm518, %v1241, 0
        %v1254 = vsel %vm574, %v1245, 0
        %1256 = vmatpush.bf16.msra.mxu0 0
        %1257 = vmatpush.bf16.msra.mxu0 0
        %1258 = vmatpush.bf16.msra.mxu0 0
        %1259 = vmatpush.bf16.msra.mxu0 0
        %1260 = vmatpush.bf16.msra.mxu0 0
        %1261 = vmatpush.bf16.msra.mxu0 0
        %1262 = vmatpush.bf16.msra.mxu0 %v1254
        %1263 = vmatpush.bf16.msra.mxu0 %v1243
        %1264 = vmatmul.bf16.gmra.mxu0 %v1248
        %v1265 = vpop.f32.mrf.mxu0
        %v1266 = vadd.f32 0.0, %v1265
        %v1267 = vpop.f32.mrf.mxu0
        %v1268 = vadd.f32 0.0, %v1267
        %1269 = vmatmul.bf16.gmra.mxu0 %v1251
        %v1270 = vpop.f32.mrf.mxu0
        %v1271 = vadd.f32 0.0, %v1270
        %v1272 = vpop.f32.mrf.mxu0
        %1273 = vdwg.mxu0
        %1274 = vrot.lane.b32.xlu0 %v1162, 120
        %v1275 = vpop.permute.xlu0 %1274
        %1276 = vrot.lane.b32.xlu0 %v1163, 120
        %v1277 = vpop.permute.xlu0 %1276
        %1278 = vrot.lane.b32.xlu0 %v1162, 88
        %v1279 = vpop.permute.xlu0 %1278
        %1280 = vrot.lane.b32.xlu0 %v1163, 88
        %v1281 = vpop.permute.xlu0 %1280
        %v1283 = vsel %vm487, %v1275, 0
        %v1286 = vsel %vm487, %v1277, 0
        %v1289 = vsel %vm487, %v1279, 0
        %v1292 = vsel %vm487, %v1281, 0
        %1294 = vmatpush.bf16.xpose.msra.mxu0 0
        %1295 = vmatpush.bf16.xpose.msra.mxu0 0
        %1296 = vmatpush.bf16.xpose.msra.mxu0 0
        %1297 = vmatpush.bf16.xpose.msra.mxu0 0
        %1298 = vmatpush.bf16.xpose.msra.mxu0 0
        %1299 = vmatpush.bf16.xpose.msra.mxu0 0
        %1300 = vmatpush.bf16.xpose.msra.mxu0 %v1292
        %1301 = vmatpush.bf16.xpose.msra.mxu0 %v1289
        %1302 = vmatmul.bf16.gmra.mxu0 %v1283
        %v1303 = vpop.f32.mrf.mxu0
        %v1304 = vadd.f32 %v425, %v1303
        %v1305 = vpop.f32.mrf.mxu0
        %v1306 = vadd.f32 %v425, %v1305
        %1307 = vmatmul.bf16.gmra.mxu0 %v1286
        %v1308 = vpop.f32.mrf.mxu0
        %v1309 = vadd.f32 %v425, %v1308
        %v1310 = vpop.f32.mrf.mxu0
        %1311 = vdwg.mxu0
        %v1312 = vsel %vm518, %v1304, -inf
        %1313 = vmax.xlane.f32.xlu0 %v1312
        %v1314 = vpop.xlane.xlu0 %1313
        %v1315 = vsel %vm518, %v1306, -inf
        %1316 = vmax.xlane.f32.xlu0 %v1315
        %v1317 = vpop.xlane.xlu0 %1316
        %v1318 = vsel %vm518, %v1309, -inf
        %1319 = vmax.xlane.f32.xlu0 %v1318
        %v1320 = vpop.xlane.xlu0 %1319
        %v1321 = vsub.f32 %v1304, %v1314
        %v1322 = vsub.f32 %v1306, %v1317
        %v1323 = vsub.f32 %v1309, %v1320
        %v1324 = vmul.f32 %v1321, 1.442695
        %v1325 = vpow.pop %v1324
        %v1326 = vmul.f32 %v1322, 1.442695
        %v1327 = vpow.pop %v1326
        %v1328 = vmul.f32 %v1323, 1.442695
        %v1329 = vpow.pop %v1328
        %v1330 = vsel %vm518, %v1325, 0.0
        %1331 = vadd.xlane.f32.xlu0 %v1330
        %v1332 = vpop.xlane.xlu0 %1331
        %v1333 = vsel %vm518, %v1327, 0.0
        %1334 = vadd.xlane.f32.xlu0 %v1333
        %v1335 = vpop.xlane.xlu0 %1334
        %v1336 = vsel %vm518, %v1329, 0.0
        %1337 = vadd.xlane.f32.xlu0 %v1336
        %v1338 = vpop.xlane.xlu0 %1337
        %v1339 = vrcp.pop %v1332
        %v1340 = vrcp.pop %v1335
        %v1341 = vrcp.pop %v1338
        %v1342 = vmul.f32 %v1325, %v1339
        %v1343 = vmul.f32 %v1327, %v1340
        %v1344 = vmul.f32 %v1329, %v1341
        %v1345 = vpack.c.bf16 %v1342, %v1342
        %v1346 = vpack.c.bf16 %v1343, %v1343
        %v1347 = vpack.c.bf16 %v1344, %v1344
        %v1351 = vunpack.c.l.b16 %v1345
        %v1352 = vunpack.c.l.b16 %v1346
        %v1353 = vunpack.c.l.b16 %v1347
        %v1354 = vpack.c.b16 %v1352, %v1351
        %v1355 = vpack.c.b16 %v1353, %v1353
        %1356 = vrot.lane.b32.xlu0 %v1162, 56
        %v1357 = vpop.permute.xlu0 %1356
        %1358 = vrot.lane.b32.xlu0 %v1163, 56
        %v1359 = vpop.permute.xlu0 %1358
        %v1362 = vsel %vm518, %v1354, 0
        %v1365 = vsel %vm518, %v1355, 0
        %v1368 = vsel %vm574, %v1359, 0
        %1370 = vmatpush.bf16.msra.mxu0 0
        %1371 = vmatpush.bf16.msra.mxu0 0
        %1372 = vmatpush.bf16.msra.mxu0 0
        %1373 = vmatpush.bf16.msra.mxu0 0
        %1374 = vmatpush.bf16.msra.mxu0 0
        %1375 = vmatpush.bf16.msra.mxu0 0
        %1376 = vmatpush.bf16.msra.mxu0 %v1368
        %1377 = vmatpush.bf16.msra.mxu0 %v1357
        %1378 = vmatmul.bf16.gmra.mxu0 %v1362
        %v1379 = vpop.f32.mrf.mxu0
        %v1380 = vadd.f32 0.0, %v1379
        %v1381 = vpop.f32.mrf.mxu0
        %v1382 = vadd.f32 0.0, %v1381
        %1383 = vmatmul.bf16.gmra.mxu0 %v1365
        %v1384 = vpop.f32.mrf.mxu0
        %v1385 = vadd.f32 0.0, %v1384
        %v1386 = vpop.f32.mrf.mxu0
        %1387 = vdwg.mxu0
        %1388 = vrot.lane.b32.xlu0 %v1162, 112
        %v1389 = vpop.permute.xlu0 %1388
        %1390 = vrot.lane.b32.xlu0 %v1163, 112
        %v1391 = vpop.permute.xlu0 %1390
        %1392 = vrot.lane.b32.xlu0 %v1162, 80
        %v1393 = vpop.permute.xlu0 %1392
        %1394 = vrot.lane.b32.xlu0 %v1163, 80
        %v1395 = vpop.permute.xlu0 %1394
        %v1397 = vsel %vm487, %v1389, 0
        %v1400 = vsel %vm487, %v1391, 0
        %v1403 = vsel %vm487, %v1393, 0
        %v1406 = vsel %vm487, %v1395, 0
        %1408 = vmatpush.bf16.xpose.msra.mxu0 0
        %1409 = vmatpush.bf16.xpose.msra.mxu0 0
        %1410 = vmatpush.bf16.xpose.msra.mxu0 0
        %1411 = vmatpush.bf16.xpose.msra.mxu0 0
        %1412 = vmatpush.bf16.xpose.msra.mxu0 0
        %1413 = vmatpush.bf16.xpose.msra.mxu0 0
        %1414 = vmatpush.bf16.xpose.msra.mxu0 %v1406
        %1415 = vmatpush.bf16.xpose.msra.mxu0 %v1403
        %1416 = vmatmul.bf16.gmra.mxu0 %v1397
        %v1417 = vpop.f32.mrf.mxu0
        %v1418 = vadd.f32 %v425, %v1417
        %v1419 = vpop.f32.mrf.mxu0
        %v1420 = vadd.f32 %v425, %v1419
        %1421 = vmatmul.bf16.gmra.mxu0 %v1400
        %v1422 = vpop.f32.mrf.mxu0
        %v1423 = vadd.f32 %v425, %v1422
        %v1424 = vpop.f32.mrf.mxu0
        %1425 = vdwg.mxu0
        %v1426 = vsel %vm518, %v1418, -inf
        %1427 = vmax.xlane.f32.xlu0 %v1426
        %v1428 = vpop.xlane.xlu0 %1427
        %v1429 = vsel %vm518, %v1420, -inf
        %1430 = vmax.xlane.f32.xlu0 %v1429
        %v1431 = vpop.xlane.xlu0 %1430
        %v1432 = vsel %vm518, %v1423, -inf
        %1433 = vmax.xlane.f32.xlu0 %v1432
        %v1434 = vpop.xlane.xlu0 %1433
        %v1435 = vsub.f32 %v1418, %v1428
        %v1436 = vsub.f32 %v1420, %v1431
        %v1437 = vsub.f32 %v1423, %v1434
        %v1438 = vmul.f32 %v1435, 1.442695
        %v1439 = vpow.pop %v1438
        %v1440 = vmul.f32 %v1436, 1.442695
        %v1441 = vpow.pop %v1440
        %v1442 = vmul.f32 %v1437, 1.442695
        %v1443 = vpow.pop %v1442
        %v1444 = vsel %vm518, %v1439, 0.0
        %1445 = vadd.xlane.f32.xlu0 %v1444
        %v1446 = vpop.xlane.xlu0 %1445
        %v1447 = vsel %vm518, %v1441, 0.0
        %1448 = vadd.xlane.f32.xlu0 %v1447
        %v1449 = vpop.xlane.xlu0 %1448
        %v1450 = vsel %vm518, %v1443, 0.0
        %1451 = vadd.xlane.f32.xlu0 %v1450
        %v1452 = vpop.xlane.xlu0 %1451
        %v1453 = vrcp.pop %v1446
        %v1454 = vrcp.pop %v1449
        %v1455 = vrcp.pop %v1452
        %v1456 = vmul.f32 %v1439, %v1453
        %v1457 = vmul.f32 %v1441, %v1454
        %v1458 = vmul.f32 %v1443, %v1455
        %v1459 = vpack.c.bf16 %v1456, %v1456
        %v1460 = vpack.c.bf16 %v1457, %v1457
        %v1461 = vpack.c.bf16 %v1458, %v1458
        %v1465 = vunpack.c.l.b16 %v1459
        %v1466 = vunpack.c.l.b16 %v1460
        %v1467 = vunpack.c.l.b16 %v1461
        %v1468 = vpack.c.b16 %v1466, %v1465
        %v1469 = vpack.c.b16 %v1467, %v1467
        %1470 = vrot.lane.b32.xlu0 %v1162, 48
        %v1471 = vpop.permute.xlu0 %1470
        %1472 = vrot.lane.b32.xlu0 %v1163, 48
        %v1473 = vpop.permute.xlu0 %1472
        %v1476 = vsel %vm518, %v1468, 0
        %v1479 = vsel %vm518, %v1469, 0
        %v1482 = vsel %vm574, %v1473, 0
        %1484 = vmatpush.bf16.msra.mxu0 0
        %1485 = vmatpush.bf16.msra.mxu0 0
        %1486 = vmatpush.bf16.msra.mxu0 0
        %1487 = vmatpush.bf16.msra.mxu0 0
        %1488 = vmatpush.bf16.msra.mxu0 0
        %1489 = vmatpush.bf16.msra.mxu0 0
        %1490 = vmatpush.bf16.msra.mxu0 %v1482
        %1491 = vmatpush.bf16.msra.mxu0 %v1471
        %1492 = vmatmul.bf16.gmra.mxu0 %v1476
        %v1493 = vpop.f32.mrf.mxu0
        %v1494 = vadd.f32 0.0, %v1493
        %v1495 = vpop.f32.mrf.mxu0
        %v1496 = vadd.f32 0.0, %v1495
        %1497 = vmatmul.bf16.gmra.mxu0 %v1479
        %v1498 = vpop.f32.mrf.mxu0
        %v1499 = vadd.f32 0.0, %v1498
        %v1500 = vpop.f32.mrf.mxu0
        %1501 = vdwg.mxu0
        %1502 = vrot.lane.b32.xlu0 %v1162, 104
        %v1503 = vpop.permute.xlu0 %1502
        %1504 = vrot.lane.b32.xlu0 %v1163, 104
        %v1505 = vpop.permute.xlu0 %1504
        %1506 = vrot.lane.b32.xlu0 %v1162, 72
        %v1507 = vpop.permute.xlu0 %1506
        %1508 = vrot.lane.b32.xlu0 %v1163, 72
        %v1509 = vpop.permute.xlu0 %1508
        %v1511 = vsel %vm487, %v1503, 0
        %v1514 = vsel %vm487, %v1505, 0
        %v1517 = vsel %vm487, %v1507, 0
        %v1520 = vsel %vm487, %v1509, 0
        %1522 = vmatpush.bf16.xpose.msra.mxu0 0
        %1523 = vmatpush.bf16.xpose.msra.mxu0 0
        %1524 = vmatpush.bf16.xpose.msra.mxu0 0
        %1525 = vmatpush.bf16.xpose.msra.mxu0 0
        %1526 = vmatpush.bf16.xpose.msra.mxu0 0
        %1527 = vmatpush.bf16.xpose.msra.mxu0 0
        %1528 = vmatpush.bf16.xpose.msra.mxu0 %v1520
        %1529 = vmatpush.bf16.xpose.msra.mxu0 %v1517
        %1530 = vmatmul.bf16.gmra.mxu0 %v1511
        %v1531 = vpop.f32.mrf.mxu0
        %v1532 = vadd.f32 %v425, %v1531
        %v1533 = vpop.f32.mrf.mxu0
        %v1534 = vadd.f32 %v425, %v1533
        %1535 = vmatmul.bf16.gmra.mxu0 %v1514
        %v1536 = vpop.f32.mrf.mxu0
        %v1537 = vadd.f32 %v425, %v1536
        %v1538 = vpop.f32.mrf.mxu0
        %1539 = vdwg.mxu0
        %v1540 = vsel %vm518, %v1532, -inf
        %1541 = vmax.xlane.f32.xlu0 %v1540
        %v1542 = vpop.xlane.xlu0 %1541
        %v1543 = vsel %vm518, %v1534, -inf
        %1544 = vmax.xlane.f32.xlu0 %v1543
        %v1545 = vpop.xlane.xlu0 %1544
        %v1546 = vsel %vm518, %v1537, -inf
        %1547 = vmax.xlane.f32.xlu0 %v1546
        %v1548 = vpop.xlane.xlu0 %1547
        %v1549 = vsub.f32 %v1532, %v1542
        %v1550 = vsub.f32 %v1534, %v1545
        %v1551 = vsub.f32 %v1537, %v1548
        %v1552 = vmul.f32 %v1549, 1.442695
        %v1553 = vpow.pop %v1552
        %v1554 = vmul.f32 %v1550, 1.442695
        %v1555 = vpow.pop %v1554
        %v1556 = vmul.f32 %v1551, 1.442695
        %v1557 = vpow.pop %v1556
        %v1558 = vsel %vm518, %v1553, 0.0
        %1559 = vadd.xlane.f32.xlu0 %v1558
        %v1560 = vpop.xlane.xlu0 %1559
        %v1561 = vsel %vm518, %v1555, 0.0
        %1562 = vadd.xlane.f32.xlu0 %v1561
        %v1563 = vpop.xlane.xlu0 %1562
        %v1564 = vsel %vm518, %v1557, 0.0
        %1565 = vadd.xlane.f32.xlu0 %v1564
        %v1566 = vpop.xlane.xlu0 %1565
        %v1567 = vrcp.pop %v1560
        %v1568 = vrcp.pop %v1563
        %v1569 = vrcp.pop %v1566
        %v1570 = vmul.f32 %v1553, %v1567
        %v1571 = vmul.f32 %v1555, %v1568
        %v1572 = vmul.f32 %v1557, %v1569
        %v1573 = vpack.c.bf16 %v1570, %v1570
        %v1574 = vpack.c.bf16 %v1571, %v1571
        %v1575 = vpack.c.bf16 %v1572, %v1572
        %v1579 = vunpack.c.l.b16 %v1573
        %v1580 = vunpack.c.l.b16 %v1574
        %v1581 = vunpack.c.l.b16 %v1575
        %v1582 = vpack.c.b16 %v1580, %v1579
        %v1583 = vpack.c.b16 %v1581, %v1581
        %1584 = vrot.lane.b32.xlu0 %v1162, 40
        %v1585 = vpop.permute.xlu0 %1584
        %1586 = vrot.lane.b32.xlu0 %v1163, 40
        %v1587 = vpop.permute.xlu0 %1586
        %v1590 = vsel %vm518, %v1582, 0
        %v1593 = vsel %vm518, %v1583, 0
        %v1596 = vsel %vm574, %v1587, 0
        %1598 = vmatpush.bf16.msra.mxu0 0
        %1599 = vmatpush.bf16.msra.mxu0 0
        %1600 = vmatpush.bf16.msra.mxu0 0
        %1601 = vmatpush.bf16.msra.mxu0 0
        %1602 = vmatpush.bf16.msra.mxu0 0
        %1603 = vmatpush.bf16.msra.mxu0 0
        %1604 = vmatpush.bf16.msra.mxu0 %v1596
        %1605 = vmatpush.bf16.msra.mxu0 %v1585
        %1606 = vmatmul.bf16.gmra.mxu0 %v1590
        %v1607 = vpop.f32.mrf.mxu0
        %v1608 = vadd.f32 0.0, %v1607
        %v1609 = vpop.f32.mrf.mxu0
        %v1610 = vadd.f32 0.0, %v1609
        %1611 = vmatmul.bf16.gmra.mxu0 %v1593
        %v1612 = vpop.f32.mrf.mxu0
        %v1613 = vadd.f32 0.0, %v1612
        %v1614 = vpop.f32.mrf.mxu0
        %1615 = vdwg.mxu0
        %1619 = vrot.lane.b32.xlu0 %v1380, 8
        %v1620 = vpop.permute.xlu0 %1619
        %1621 = vrot.lane.b32.xlu0 %v1382, 8
        %v1622 = vpop.permute.xlu0 %1621
        %1623 = vrot.lane.b32.xlu0 %v1385, 8
        %v1624 = vpop.permute.xlu0 %1623
        %1631 = vrot.lane.b32.xlu0 %v1494, 16
        %v1632 = vpop.permute.xlu0 %1631
        %1633 = vrot.lane.b32.xlu0 %v1496, 16
        %v1634 = vpop.permute.xlu0 %1633
        %1635 = vrot.lane.b32.xlu0 %v1499, 16
        %v1636 = vpop.permute.xlu0 %1635
        %1643 = vrot.lane.b32.xlu0 %v1608, 24
        %v1644 = vpop.permute.xlu0 %1643
        %1645 = vrot.lane.b32.xlu0 %v1610, 24
        %v1646 = vpop.permute.xlu0 %1645
        %1647 = vrot.lane.b32.xlu0 %v1613, 24
        %v1648 = vpop.permute.xlu0 %1647
        %v1652 = vsel %vm487, %v1266, %v1620
        %v1653 = vsel %vm487, %v1268, %v1622
        %v1654 = vsel %vm487, %v1271, %v1624
        %v1655 = vsel %vm977, %v1652, %v1632
        %v1656 = vsel %vm977, %v1653, %v1634
        %v1657 = vsel %vm977, %v1654, %v1636
        %v1658 = vsel %vm518, %v1655, %v1644
        %v1659 = vsel %vm518, %v1656, %v1646
        %v1660 = vsel %vm518, %v1657, %v1648
        %v1661 = vpack.c.bf16 %v1659, %v1658
        %v1662 = vpack.c.bf16 %v1660, %v1660
        %v1667 = vunpack.c.l.b16 %v1111
        %v1668 = vunpack.c.l.b16 %v1112
        %v1669 = vunpack.c.l.b16 %v1113
        %v1670 = vunpack.c.l.b16 %v1114
        %v1671 = vpack.c.b16 %v1668, %v1667
        %v1672 = vpack.c.b16 %v1670, %v1669
        %v1676 = vsel %vm336, %v1661, 0
        %v1679 = vsel %vm336, %v1662, 0
        %1681 = vmatpush.bf16.msra.mxu0 0
        %1682 = vmatpush.bf16.msra.mxu0 0
        %1683 = vmatpush.bf16.msra.mxu0 0
        %1684 = vmatpush.bf16.msra.mxu0 0
        %1685 = vmatpush.bf16.msra.mxu0 0
        %1686 = vmatpush.bf16.msra.mxu0 0
        %1687 = vmatpush.bf16.msra.mxu0 %v1672
        %1688 = vmatpush.bf16.msra.mxu0 %v1671
        %1689 = vmatmul.bf16.gmra.mxu0 %v1676
        %v1690 = vpop.f32.mrf.mxu0
        %v1691 = vadd.f32 0.0, %v1690
        %v1692 = vpop.f32.mrf.mxu0
        %1693 = vmatmul.bf16.gmra.mxu0 %v1679
        %v1694 = vpop.f32.mrf.mxu0
        %v1695 = vpop.f32.mrf.mxu0
        %1696 = vdwg.mxu0
        %v1697 = vadd.f32 %v1102, %v1691
        %s1698 = scalar_lea.vmem %s5, 1
        %v1699 = vld [vmem:[%s1698] sm:$0x1]
        %s1700 = scalar_lea.vmem %s6, 1
        %v1701 = vld [vmem:[%s1700] sm:$0x1]
        %v1702 = vsel %vm336, %v1697, 0.0
        %1703 = vadd.xlane.f32.xlu0 %v1702
        %v1704 = vpop.xlane.xlu0 %1703
        %v1705 = vmul.f32 %v1704, %v352
        %v1706 = vsub.f32 %v1697, %v1705
        %v1707 = vmul.f32 %v1706, %v1706
        %v1708 = vsel %vm336, %v1707, 0.0
        %1709 = vadd.xlane.f32.xlu0 %v1708
        %v1710 = vpop.xlane.xlu0 %1709
        %v1711 = vmul.f32 %v1710, %v352
        %v1712 = vadd.f32 %v1711, 1e-05
        %v1713 = vrsqrt.pop %v1712
        %v1714 = vmul.f32 %v1713, %v1712
        %v1715 = vmul.f32 %v1714, %v1713
        %v1716 = vmul.f32 0.5, %v1715
        %v1717 = vsub.f32 1.5, %v1716
        %v1718 = vmul.f32 %v1713, %v1717
        %vm1719 = vweird.f32 %v1712
        %vm1720 = vweird.f32 %v1713
        %vm1721 = vmor %vm1719, %vm1720
        %v1722 = vsel %vm1721, %v1713, %v1718
        %v1723 = vmul.f32 %v1706, %v1722
        %v1725 = vperm.slane %v1699, 0
        %v1727 = vmul.f32 %v1723, %v1725
        %v1729 = vperm.slane %v1701, 0
        %v1731 = vadd.f32 %v1727, %v1729
        %v1732 = vpack.c.bf16 %v1731, %v1731
        %v1733 = vld [vmem:[%s7] sm:$0xf]
        %v1734 = vld [vmem:[%s7 + $0x4] sm:$0xf]
        %v1735 = vld [vmem:[%s7 + $0x8] sm:$0xf]
        %v1736 = vld [vmem:[%s7 + $0xc] sm:$0xf]
        %v1737 = vld [vmem:[%s8] sm:$0x1]
        %v1742 = vunpack.c.l.b16 %v1733
        %v1743 = vunpack.c.l.b16 %v1734
        %v1744 = vunpack.c.l.b16 %v1735
        %v1745 = vunpack.c.l.b16 %v1736
        %v1746 = vpack.c.b16 %v1743, %v1742
        %v1747 = vpack.c.b16 %v1745, %v1744
        %v1751 = vsel %vm336, %v1732, 0
        %1753 = vmatpush.bf16.msra.mxu0 0
        %1754 = vmatpush.bf16.msra.mxu0 0
        %1755 = vmatpush.bf16.msra.mxu0 0
        %1756 = vmatpush.bf16.msra.mxu0 0
        %1757 = vmatpush.bf16.msra.mxu0 0
        %1758 = vmatpush.bf16.msra.mxu0 0
        %1759 = vmatpush.bf16.msra.mxu0 %v1747
        %1760 = vmatpush.bf16.msra.mxu0 %v1746
        %1761 = vmatmul.bf16.gmra.mxu0 %v1751
        %v1762 = vpop.f32.mrf.mxu0
        %v1763 = vadd.f32 %v1737, %v1762
        %v1764 = vpop.f32.mrf.mxu0
        %1765 = vdwg.mxu0
        %1766 = vst [vmem:[%s324] sm:$0x1] %v1763
        %s1767 = sand.u32 %s225, 1
        %s1768 = scalar_lea.sflag [#allocation3], %s1767
        %s1769 = sand.u32 %s225, 1
        %s1770 = scalar_lea.vmem [#allocation2], %s1769
        // Predicated region
        $region57: #{attention_classifier_forward.1} parent=55 // pred_check
          %p1771 = pneg %p235
        $region58: #{attention_classifier_forward.1} parent=55 // pred_check_branch
          %1773 = sbr.rel (%p1771) target = $region60
        $region59: #{attention_classifier_forward.1} parent=55 // pred_region
          %1775 = vsyncadd %s1768, 0
          %s1776 = scalar_lea.hbm %s9, %s23
          %s1778 = sshll.u32 %s1770, 4
          %s1779 = int_to_ptr.vmem [resolvable:$true] %s1778
          %s1780 = sshll.u32 %s1776, 4
          %s1781 = int_to_ptr.hbm [resolvable:$true] %s1780
          %1783 = dma.vmem_to_hbm [thread:$0]  %s1779, 16, %s1781, %s1768
        $region60: #{attention_classifier_forward.1} parent=55 // pred_fallthru
          _
      $region56: #{attention_classifier_forward.1} parent=5 // pred_fallthru
        _
      %p1784 = scmp.le.s32.totalorder 2, %s18
      // Predicated region
      $region61: #{attention_classifier_forward.1} parent=5 // pred_check
        %p1785 = pneg %p1784
      $region62: #{attention_classifier_forward.1} parent=5 // pred_check_branch
        %1787 = sbr.rel (%p1785) target = $region64
      $region63: #{attention_classifier_forward.1} parent=5 // pred_region
        %s1788 = ssub.s32 %s18, 2
        // Predicated region
        $region65: #{attention_classifier_forward.1} parent=63 // pred_check
          %p1789 = pneg %p241
        $region66: #{attention_classifier_forward.1} parent=63 // pred_check_branch
          %1791 = sbr.rel (%p1789) target = $region68
        $region67: #{attention_classifier_forward.1} parent=63 // pred_region
          %s1792 = sand.u32 %s226, 1
          %s1793 = scalar_lea.sflag [#allocation3], %s1792
          %s1794 = sand.u32 %s226, 1
          %s1795 = scalar_lea.vmem [#allocation2], %s1794
          %1797 = dma.done %s1793, 16
        $region68: #{attention_classifier_forward.1} parent=63 // pred_fallthru
          _
      $region64: #{attention_classifier_forward.1} parent=5 // pred_fallthru
        _
    $region6: #{attention_classifier_forward.1} parent=1 // loop_footer
      %s22 = sadd.s32 1, %s18
    $region7: #{attention_classifier_forward.1} parent=1 // loop_footer_branch
      %17 = sbr.rel target = $region3
    $region8: #{attention_classifier_forward.1} parent=1 // loop_exit
      _
    %1798 = vsyncpa [#allocation3], 1
    %s1799 = scalar_lea.sflag [#allocation3], 1
    %1800 = vsyncpa %s1799, 1

</llo_original>
